<compile_context>
chip_gen: v6e
topology: v6e:2x2x1
jax: 0.10.0
libtpu: 0.0.40
codegen_flags: <defaults>
</compile_context>

<pallas_src>
import jax
import jax.numpy as jnp
from jax.experimental import pallas as pl
from jax.experimental.pallas import tpu as pltpu

HIDDEN = 500          # module hidden_dims
NUM_CLASSES = 10
H_PAD = 512           # 500 padded up to a lane-aligned multiple of 128
C_PAD = 128           # 10 padded up to one full lane width
DROP_P = 0.5          # F.dropout default
_NEG_LARGE = -1e30    # effectively -inf for the padded-logit mask


def classifier_kernel(seed_ref, x_ref, w1_ref, b1_ref, w2_ref, b2_ref, out_ref):
    tile_b = x_ref.shape[0]

    # ---- fc1 (bf16 MXU, f32 accumulate) + bias -----------------------------
    h = jnp.dot(x_ref[...], w1_ref[...], preferred_element_type=jnp.float32)
    h = h + b1_ref[...]                                     # (tile_b, 512) f32

    # ---- fused relu + dropout ----------------------------------------------
    # Counter-based hash (murmur3 finalizer) over the *global* element index,
    # so the mask is deterministic and decorrelated across batch tiles.
    row = jax.lax.broadcasted_iota(jnp.int32, (tile_b, H_PAD), 0)
    col = jax.lax.broadcasted_iota(jnp.int32, (tile_b, H_PAD), 1)
    grow = row + pl.program_id(0) * tile_b
    idx = (grow * H_PAD + col).astype(jnp.uint32)
    z = idx + seed_ref[0].astype(jnp.uint32) * jnp.uint32(0x9E3779B9)
    z = z ^ (z >> 16)
    z = z * jnp.uint32(0x85EBCA6B)
    z = z ^ (z >> 13)
    z = z * jnp.uint32(0xC2B2AE35)
    z = z ^ (z >> 16)
    keep = (z & jnp.uint32(0x80000000)) == jnp.uint32(0)    # P(keep) = 0.5
    # Single select implements relu + dropout + 1/(1-p) scaling.
    h = jnp.where(keep & (h > 0.0), h * (1.0 / (1.0 - DROP_P)), 0.0)

    # ---- fc2 (bf16 MXU, f32 accumulate) + bias + relu ----------------------
    logits = jnp.dot(h.astype(jnp.bfloat16), w2_ref[...],
                     preferred_element_type=jnp.float32)
    logits = jnp.maximum(logits + b2_ref[...], 0.0)         # (tile_b, 128)

    # ---- mask padded class lanes, then log_softmax over dim=1 --------------
    ccol = jax.lax.broadcasted_iota(jnp.int32, logits.shape, 1)
    logits = jnp.where(ccol < NUM_CLASSES, logits, _NEG_LARGE)
    m = jnp.max(logits, axis=1, keepdims=True)
    lse = m + jnp.log(jnp.sum(jnp.exp(logits - m), axis=1, keepdims=True))
    out_ref[...] = logits - lse


def classifier_forward(x, w1, b1, w2, b2, seed, *, tile_b=256):
    """x: (B, 500) f32; w1: (500, 500) (in, out); b1: (500,); w2: (500, 10); b2: (10,)."""
    B, f_in = x.shape
    assert f_in == HIDDEN

    # Batch tile: multiple of 8 sublanes, no larger than the (padded) batch.
    tile_b = max(8, min(int(tile_b), ((B + 7) // 8) * 8))
    tile_b = ((tile_b + 7) // 8) * 8
    b_pad = pl.cdiv(B, tile_b) * tile_b
    grid = (b_pad // tile_b,)

    # Zero-pad to (8,128)-aligned shapes; cast matmul operands to bf16.
    x_p = jnp.zeros((b_pad, H_PAD), jnp.bfloat16).at[:B, :HIDDEN].set(
        x.astype(jnp.bfloat16))
    w1_p = jnp.zeros((H_PAD, H_PAD), jnp.bfloat16).at[:HIDDEN, :HIDDEN].set(
        w1.astype(jnp.bfloat16))
    b1_p = jnp.zeros((1, H_PAD), jnp.float32).at[:, :HIDDEN].set(
        b1.reshape(1, HIDDEN).astype(jnp.float32))
    w2_p = jnp.zeros((H_PAD, C_PAD), jnp.bfloat16).at[:HIDDEN, :NUM_CLASSES].set(
        w2.astype(jnp.bfloat16))
    b2_p = jnp.zeros((1, C_PAD), jnp.float32).at[:, :NUM_CLASSES].set(
        b2.reshape(1, NUM_CLASSES).astype(jnp.float32))
    seed_arr = jnp.asarray(seed, jnp.int32).reshape((1,))

    out_p = pl.pallas_call(
        classifier_kernel,
        out_shape=jax.ShapeDtypeStruct((b_pad, C_PAD), jnp.float32),
        grid_spec=pltpu.PrefetchScalarGridSpec(
            num_scalar_prefetch=1,                 # dropout seed -> SMEM
            grid=grid,
            in_specs=[
                pl.BlockSpec((tile_b, H_PAD), lambda i, seed: (i, 0)),  # x tile
                pl.BlockSpec((H_PAD, H_PAD), lambda i, seed: (0, 0)),   # w1 (resident)
                pl.BlockSpec((1, H_PAD),     lambda i, seed: (0, 0)),   # b1
                pl.BlockSpec((H_PAD, C_PAD), lambda i, seed: (0, 0)),   # w2 (resident)
                pl.BlockSpec((1, C_PAD),     lambda i, seed: (0, 0)),   # b2
            ],
            out_specs=pl.BlockSpec((tile_b, C_PAD), lambda i, seed: (i, 0)),
        ),
        compiler_params=pltpu.CompilerParams(
            dimension_semantics=("parallel",),     # shard batch tiles across TCs (v7x)
        ),
    )(seed_arr, x_p, w1_p, b1_p, w2_p, b2_p)

    return out_p[:B, :NUM_CLASSES]


if __name__ == "__main__":
    key = jax.random.PRNGKey(0)
    k_x, k_w1, k_b1, k_w2, k_b2 = jax.random.split(key, 5)

    B = 32  # small demo batch; tile_b=8 exercises a 4-step batch grid

    x = jax.random.normal(k_x, (B, HIDDEN), dtype=jnp.float32)
    # Weights stored pre-transposed: (in_features, out_features).
    w1 = jax.random.normal(k_w1, (HIDDEN, HIDDEN), dtype=jnp.float32) / jnp.sqrt(HIDDEN)
    b1 = jax.random.normal(k_b1, (HIDDEN,), dtype=jnp.float32) * 0.01
    w2 = jax.random.normal(k_w2, (HIDDEN, NUM_CLASSES), dtype=jnp.float32) / jnp.sqrt(HIDDEN)
    b2 = jax.random.normal(k_b2, (NUM_CLASSES,), dtype=jnp.float32) * 0.01
    seed = 0

    out = classifier_forward(x, w1, b1, w2, b2, seed, tile_b=8)
    out = jax.block_until_ready(out)

    assert out.shape == (B, NUM_CLASSES)
    assert bool(jnp.all(jnp.isfinite(out)))
    # log_softmax rows must logsumexp to ~0
    row_lse = jax.nn.logsumexp(out, axis=1)
    assert bool(jnp.all(jnp.abs(row_lse) < 1e-3)), row_lse

    print("KERNEL_OK")
</pallas_src>

<mosaic_0001>
module attributes {stable_mosaic.version = 11 : i64} {
  func.func @classifier_kernel(%arg0: i32, %arg1: memref<1xi32, #tpu.memory_space<smem>>, %arg2: memref<8x512xbf16, #tpu.memory_space<vmem>>, %arg3: memref<512x512xbf16, #tpu.memory_space<vmem>>, %arg4: memref<1x512xf32, #tpu.memory_space<vmem>>, %arg5: memref<512x128xbf16, #tpu.memory_space<vmem>>, %arg6: memref<1x128xf32, #tpu.memory_space<vmem>>, %arg7: memref<8x128xf32, #tpu.memory_space<vmem>>) attributes {dimension_semantics = [#tpu.dimension_semantics<parallel>], iteration_bounds = array<i64: 4>, scalar_prefetch = 1 : i64, scratch_operands = 0 : i64, tpu.core_type = #tpu.core_type<tc>, window_params = [{transform_indices = @transform_0, window_bounds = array<i64: 8, 512>}, {pipeline_mode = #tpu.pipeline_mode<synchronous>, transform_indices = @transform_1, window_bounds = array<i64: 512, 512>}, {pipeline_mode = #tpu.pipeline_mode<synchronous>, transform_indices = @transform_2, window_bounds = array<i64: 1, 512>}, {pipeline_mode = #tpu.pipeline_mode<synchronous>, transform_indices = @transform_3, window_bounds = array<i64: 512, 128>}, {pipeline_mode = #tpu.pipeline_mode<synchronous>, transform_indices = @transform_4, window_bounds = array<i64: 1, 128>}, {transform_indices = @transform_5, window_bounds = array<i64: 8, 128>}]} {
    %c0 = arith.constant 0 : index
    %c0_0 = arith.constant 0 : index
    %0 = vector.load %arg2[%c0, %c0_0] : memref<8x512xbf16, #tpu.memory_space<vmem>>, vector<8x512xbf16>
    %c0_1 = arith.constant 0 : index
    %c0_2 = arith.constant 0 : index
    %1 = vector.load %arg3[%c0_1, %c0_2] : memref<512x512xbf16, #tpu.memory_space<vmem>>, vector<512x512xbf16>
    %cst = arith.constant dense<0.000000e+00> : vector<8x512xf32>
    %2 = tpu.matmul %0, %1, %cst {dimension_numbers = #tpu.dot_dimension_numbers<[1], [0], [0], [1], [0, 0, 1, 1], [], []>} : vector<8x512xbf16>, vector<512x512xbf16>, vector<8x512xf32> -> vector<8x512xf32>
    %c0_3 = arith.constant 0 : index
    %c0_4 = arith.constant 0 : index
    %3 = vector.load %arg4[%c0_3, %c0_4] : memref<1x512xf32, #tpu.memory_space<vmem>>, vector<1x512xf32>
    %4 = vector.broadcast %3 : vector<1x512xf32> to vector<8x512xf32>
    %5 = arith.addf %2, %4 : vector<8x512xf32>
    %6 = tpu.iota {dimensions = array<i32: 0>} : vector<8x512xi32>
    %7 = tpu.iota {dimensions = array<i32: 1>} : vector<8x512xi32>
    %c8_i32 = arith.constant 8 : i32
    %8 = arith.muli %arg0, %c8_i32 : i32
    %9 = vector.broadcast %8 : i32 to vector<8x512xi32>
    %10 = arith.addi %6, %9 : vector<8x512xi32>
    %c512_i32 = arith.constant 512 : i32
    %11 = vector.broadcast %c512_i32 : i32 to vector<8x512xi32>
    %12 = arith.muli %10, %11 : vector<8x512xi32>
    %13 = arith.addi %12, %7 : vector<8x512xi32>
    %c0_5 = arith.constant 0 : index
    %14 = memref.load %arg1[%c0_5] : memref<1xi32, #tpu.memory_space<smem>>
    %c-1640531527_i32 = arith.constant -1640531527 : i32
    %15 = arith.muli %14, %c-1640531527_i32 : i32
    %16 = vector.broadcast %15 : i32 to vector<8x512xi32>
    %17 = arith.addi %13, %16 : vector<8x512xi32>
    %c16_i32 = arith.constant 16 : i32
    %18 = vector.broadcast %c16_i32 : i32 to vector<8x512xi32>
    %19 = arith.shrui %17, %18 : vector<8x512xi32>
    %20 = arith.xori %17, %19 : vector<8x512xi32>
    %c-2048144789_i32 = arith.constant -2048144789 : i32
    %21 = vector.broadcast %c-2048144789_i32 : i32 to vector<8x512xi32>
    %22 = arith.muli %20, %21 : vector<8x512xi32>
    %c13_i32 = arith.constant 13 : i32
    %23 = vector.broadcast %c13_i32 : i32 to vector<8x512xi32>
    %24 = arith.shrui %22, %23 : vector<8x512xi32>
    %25 = arith.xori %22, %24 : vector<8x512xi32>
    %c-1028477387_i32 = arith.constant -1028477387 : i32
    %26 = vector.broadcast %c-1028477387_i32 : i32 to vector<8x512xi32>
    %27 = arith.muli %25, %26 : vector<8x512xi32>
    %c16_i32_6 = arith.constant 16 : i32
    %28 = vector.broadcast %c16_i32_6 : i32 to vector<8x512xi32>
    %29 = arith.shrui %27, %28 : vector<8x512xi32>
    %30 = arith.xori %27, %29 : vector<8x512xi32>
    %c-2147483648_i32 = arith.constant -2147483648 : i32
    %31 = vector.broadcast %c-2147483648_i32 : i32 to vector<8x512xi32>
    %32 = arith.andi %30, %31 : vector<8x512xi32>
    %c0_i32 = arith.constant 0 : i32
    %33 = vector.broadcast %c0_i32 : i32 to vector<8x512xi32>
    %34 = arith.cmpi eq, %32, %33 : vector<8x512xi32>
    %cst_7 = arith.constant 0.000000e+00 : f32
    %35 = vector.broadcast %cst_7 : f32 to vector<8x512xf32>
    %36 = arith.cmpf ogt, %5, %35 : vector<8x512xf32>
    %37 = arith.andi %34, %36 : vector<8x512xi1>
    %cst_8 = arith.constant 2.000000e+00 : f32
    %38 = vector.broadcast %cst_8 : f32 to vector<8x512xf32>
    %39 = arith.mulf %5, %38 : vector<8x512xf32>
    %cst_9 = arith.constant 0.000000e+00 : f32
    %40 = vector.broadcast %cst_9 : f32 to vector<8x512xf32>
    %41 = arith.select %37, %39, %40 : vector<8x512xi1>, vector<8x512xf32>
    %42 = arith.truncf %41 : vector<8x512xf32> to vector<8x512xbf16>
    %c0_10 = arith.constant 0 : index
    %c0_11 = arith.constant 0 : index
    %43 = vector.load %arg5[%c0_10, %c0_11] : memref<512x128xbf16, #tpu.memory_space<vmem>>, vector<512x128xbf16>
    %cst_12 = arith.constant dense<0.000000e+00> : vector<8x128xf32>
    %44 = tpu.matmul %42, %43, %cst_12 {dimension_numbers = #tpu.dot_dimension_numbers<[1], [0], [0], [1], [0, 0, 1, 1], [], []>} : vector<8x512xbf16>, vector<512x128xbf16>, vector<8x128xf32> -> vector<8x128xf32>
    %c0_13 = arith.constant 0 : index
    %c0_14 = arith.constant 0 : index
    %45 = vector.load %arg6[%c0_13, %c0_14] : memref<1x128xf32, #tpu.memory_space<vmem>>, vector<1x128xf32>
    %46 = vector.broadcast %45 : vector<1x128xf32> to vector<8x128xf32>
    %47 = arith.addf %44, %46 : vector<8x128xf32>
    %cst_15 = arith.constant 0.000000e+00 : f32
    %48 = vector.broadcast %cst_15 : f32 to vector<8x128xf32>
    %49 = arith.maximumf %47, %48 : vector<8x128xf32>
    %50 = tpu.iota {dimensions = array<i32: 1>} : vector<8x128xi32>
    %c10_i32 = arith.constant 10 : i32
    %51 = vector.broadcast %c10_i32 : i32 to vector<8x128xi32>
    %52 = arith.cmpi slt, %50, %51 : vector<8x128xi32>
    %cst_16 = arith.constant -1.000000e+30 : f32
    %53 = vector.broadcast %cst_16 : f32 to vector<8x128xf32>
    %54 = arith.select %52, %49, %53 : vector<8x128xi1>, vector<8x128xf32>
    %cst_17 = arith.constant dense<0xFF800000> : vector<8xf32>
    %55 = vector.multi_reduction <maximumf>, %54, %cst_17 [1] : vector<8x128xf32> to vector<8xf32>
    %56 = vector.shape_cast %55 : vector<8xf32> to vector<8x1xf32>
    %57 = vector.broadcast %56 : vector<8x1xf32> to vector<8x128xf32>
    %58 = arith.subf %54, %57 : vector<8x128xf32>
    %59 = math.exp %58 : vector<8x128xf32>
    %cst_18 = arith.constant dense<0.000000e+00> : vector<8xf32>
    %60 = vector.multi_reduction <add>, %59, %cst_18 [1] : vector<8x128xf32> to vector<8xf32>
    %61 = vector.shape_cast %60 : vector<8xf32> to vector<8x1xf32>
    %62 = math.log %61 : vector<8x1xf32>
    %63 = arith.addf %56, %62 : vector<8x1xf32>
    %64 = vector.broadcast %63 : vector<8x1xf32> to vector<8x128xf32>
    %65 = arith.subf %54, %64 : vector<8x128xf32>
    %c0_19 = arith.constant 0 : index
    %c0_20 = arith.constant 0 : index
    %66 = vector.load %arg7[%c0_19, %c0_20] : memref<8x128xf32, #tpu.memory_space<vmem>>, vector<8x128xf32>
    tpu.vector_store %arg7[%c0_19, %c0_20], %65 {strides = array<i32>} : memref<8x128xf32, #tpu.memory_space<vmem>>, vector<8x128xf32>,
    return
  }
  func.func @transform_0(%arg0: i32, %arg1: memref<1xi32, #tpu.memory_space<smem>>) -> (i32, i32) {
    %c0_i32 = arith.constant 0 : i32
    %c0_i32_0 = arith.constant 0 : i32
    return %arg0, %c0_i32 : i32, i32
  }
  func.func @transform_1(%arg0: i32, %arg1: memref<1xi32, #tpu.memory_space<smem>>) -> (i32, i32) {
    %c0_i32 = arith.constant 0 : i32
    %c0_i32_0 = arith.constant 0 : i32
    %c0_i32_1 = arith.constant 0 : i32
    return %c0_i32, %c0_i32_0 : i32, i32
  }
  func.func @transform_2(%arg0: i32, %arg1: memref<1xi32, #tpu.memory_space<smem>>) -> (i32, i32) {
    %c0_i32 = arith.constant 0 : i32
    %c0_i32_0 = arith.constant 0 : i32
    %c0_i32_1 = arith.constant 0 : i32
    return %c0_i32, %c0_i32_0 : i32, i32
  }
  func.func @transform_3(%arg0: i32, %arg1: memref<1xi32, #tpu.memory_space<smem>>) -> (i32, i32) {
    %c0_i32 = arith.constant 0 : i32
    %c0_i32_0 = arith.constant 0 : i32
    %c0_i32_1 = arith.constant 0 : i32
    return %c0_i32, %c0_i32_0 : i32, i32
  }
  func.func @transform_4(%arg0: i32, %arg1: memref<1xi32, #tpu.memory_space<smem>>) -> (i32, i32) {
    %c0_i32 = arith.constant 0 : i32
    %c0_i32_0 = arith.constant 0 : i32
    %c0_i32_1 = arith.constant 0 : i32
    return %c0_i32, %c0_i32_0 : i32, i32
  }
  func.func @transform_5(%arg0: i32, %arg1: memref<1xi32, #tpu.memory_space<smem>>) -> (i32, i32) {
    %c0_i32 = arith.constant 0 : i32
    %c0_i32_0 = arith.constant 0 : i32
    return %arg0, %c0_i32 : i32, i32
  }
}

</mosaic_0001>

<llo_original>
// kernel: tpu_custom_call.1
$region0: #{tpu_custom_call.1}
  #allocation0 [shape = 'u32[]', space=smem, size = 0x4, offset = 0x4, fixed_abs, tag = 'smem constant byte address 0x4 - core index']
  #allocation1 [shape = 'u32[144,128]{1,0:T(1,128)}', space=vmem, size = 0x12000, scoped, tag = 'internal scratch']
  #allocation2 [shape = 's32[1]{0}', space=sflag, size = 0x4, scoped, tag = 'scoped memory for tpu_custom_call.1']
  #allocation3 [shape = 's32[1]{0:T(128)S(6)}', space=smem, size = 0x200, scoped, tag = 'prefetched SMEM operand 0']
  %s0 = inlined_call_operand.<no memory space> [shape: s32[1], index: 0, kind: input, shape index: {}]
  %s1 = inlined_call_operand.hbm [shape: bf16[32,512], index: 1, kind: input, shape index: {}]
  %s2 = inlined_call_operand.hbm [shape: bf16[512,512], index: 2, kind: input, shape index: {}]
  %s3 = inlined_call_operand.vmem [shape: f32[1,512], index: 3, kind: input, shape index: {}]
  %s4 = inlined_call_operand.hbm [shape: bf16[512,128], index: 4, kind: input, shape index: {}]
  %s5 = inlined_call_operand.vmem [shape: f32[1,128], index: 5, kind: input, shape index: {}]
  %s6 = inlined_call_operand.hbm [shape: f32[32,128], index: 6, kind: output, shape index: {}]
  %s7 = sld [smem:[#allocation0]]
  $region65: #{tpu_custom_call.1} parent=0
    _
  %s9 = ssub.s32 1, %s7
  %s10 = scalar_select 0, %s9, %s7
  %11 = sst [smem:[#allocation3]] %s0
  $region1: #{tpu_custom_call.1} parent=0
    #allocation4 [shape = 'u8[16384]{0}', space=vmem, size = 0x4000, scoped, tag = 'input window, operand 1']
    #allocation5 [shape = 's32[2]{0}', space=sflag, size = 0x8, scoped, tag = 'scoped memory for tpu_custom_call.1']
    #allocation6 [shape = 's32[2]{0}', space=sflag, size = 0x8, scoped, tag = 'scoped memory for tpu_custom_call.1']
    #allocation7 [shape = 'u8[524288]{0}', space=vmem, size = 0x80000, scoped, tag = 'input window, operand 2, single buffered']
    #allocation8 [shape = 's32[1]{0}', space=sflag, size = 0x4, scoped, tag = 'scoped memory for tpu_custom_call.1']
    #allocation9 [shape = 'u8[131072]{0}', space=vmem, size = 0x20000, scoped, tag = 'input window, operand 4, single buffered']
    #allocation10 [shape = 'u8[8192]{0}', space=vmem, size = 0x2000, scoped, tag = 'output window, operand 0']
    %12 = vsyncpa [#allocation5], 0
    %s13 = scalar_lea.sflag [#allocation5], 1
    %14 = vsyncpa %s13, 0
    %15 = vsyncpa [#allocation8], 0
    %16 = vsyncpa [#allocation6], 0
    %s17 = scalar_lea.sflag [#allocation6], 1
    %18 = vsyncpa %s17, 0
    loop: start=0, step=1, limit=6
    $region2: #{tpu_custom_call.1} parent=1 // loop_pre_header
      _
    $region3: #{tpu_custom_call.1} parent=1 // loop_header
      %s20 = sphi 0, %s24
      %p21 = scmp.ge.s32.totalorder %s20, 6
      %s30 = sphi 0, %s32
      %s33 = sphi 0, %s30
      %s34 = sphi 0, %s33
      %s50 = sphi 0, %s34
      %s54 = sphi 0, %s54
      %s56 = sphi 0, %s54
      %s57 = sphi 0, %s56
      %s71 = sphi 0, %s57
      %s75 = sphi 0, %s75
      %s77 = sphi 0, %s75
      %s78 = sphi 0, %s77
      %s92 = sphi 0, %s78
      %s96 = sphi 0, %s96
      %s98 = sphi 0, %s96
      %s99 = sphi 0, %s98
      %s113 = sphi 0, %s99
      %s117 = sphi 0, %s117
      %s119 = sphi 0, %s117
      %s120 = sphi 0, %s119
      %s134 = sphi 0, %s120
      %s140 = sphi 0, %s142
      %s143 = sphi 0, %s140
      %s144 = sphi 0, %s143
      %s160 = sphi 0, %s144
    $region4: #{tpu_custom_call.1} parent=1 // loop_header_branch
      %23 = sbr.rel (%p21) target = $region8
    $region5: #{tpu_custom_call.1} parent=1 // loop_body
      %s25 = ssub.s32 %s20, 1
      %s26 = ssub.s32 %s20, 2
      %s27 = sadd.s32 %s20, 1
      %s28 = ssub.s32 %s20, %s27
      %p29 = scmp.eq.s32.totalorder %s28, 0
      %s31 = sadd.s32 %s30, 1
      %s32 = scalar_select %p29, %s30, %s31
      %p35 = pneg %p29
      %p36 = scmp.eq.s32.totalorder %s20, 3
      %p37 = por %p35, %p36
      %p38 = scmp.ne.s32.totalorder %s30, %s33
      %p39 = scmp.eq.s32.totalorder %s20, 0
      %p40 = por %p38, %p39
      %p41 = scmp.ne.s32.totalorder %s30, %s33
      %p42 = scmp.eq.s32.totalorder %s25, 3
      %p43 = por %p41, %p42
      %p44 = scmp.ne.s32.totalorder %s33, %s34
      %p45 = scmp.eq.s32.totalorder %s25, 0
      %p46 = por %p44, %p45
      %p47 = scmp.ne.s32.totalorder %s33, %s34
      %p48 = scmp.eq.s32.totalorder %s26, 3
      %p49 = por %p47, %p48
      %p51 = scmp.ne.s32.totalorder %s34, %s50
      %p52 = scmp.eq.s32.totalorder %s26, 0
      %p53 = por %p51, %p52
      %s55 = sadd.s32 %s54, 1
      %p58 = scmp.eq.s32.totalorder %s20, 3
      %p59 = scmp.ne.s32.totalorder %s54, %s56
      %p60 = scmp.eq.s32.totalorder %s20, 0
      %p61 = por %p59, %p60
      %p62 = scmp.ne.s32.totalorder %s54, %s56
      %p63 = scmp.eq.s32.totalorder %s25, 3
      %p64 = por %p62, %p63
      %p65 = scmp.ne.s32.totalorder %s56, %s57
      %p66 = scmp.eq.s32.totalorder %s25, 0
      %p67 = por %p65, %p66
      %p68 = scmp.ne.s32.totalorder %s56, %s57
      %p69 = scmp.eq.s32.totalorder %s26, 3
      %p70 = por %p68, %p69
      %p72 = scmp.ne.s32.totalorder %s57, %s71
      %p73 = scmp.eq.s32.totalorder %s26, 0
      %p74 = por %p72, %p73
      %s76 = sadd.s32 %s75, 1
      %p79 = scmp.eq.s32.totalorder %s20, 3
      %p80 = scmp.ne.s32.totalorder %s75, %s77
      %p81 = scmp.eq.s32.totalorder %s20, 0
      %p82 = por %p80, %p81
      %p83 = scmp.ne.s32.totalorder %s75, %s77
      %p84 = scmp.eq.s32.totalorder %s25, 3
      %p85 = por %p83, %p84
      %p86 = scmp.ne.s32.totalorder %s77, %s78
      %p87 = scmp.eq.s32.totalorder %s25, 0
      %p88 = por %p86, %p87
      %p89 = scmp.ne.s32.totalorder %s77, %s78
      %p90 = scmp.eq.s32.totalorder %s26, 3
      %p91 = por %p89, %p90
      %p93 = scmp.ne.s32.totalorder %s78, %s92
      %p94 = scmp.eq.s32.totalorder %s26, 0
      %p95 = por %p93, %p94
      %s97 = sadd.s32 %s96, 1
      %p100 = scmp.eq.s32.totalorder %s20, 3
      %p101 = scmp.ne.s32.totalorder %s96, %s98
      %p102 = scmp.eq.s32.totalorder %s20, 0
      %p103 = por %p101, %p102
      %p104 = scmp.ne.s32.totalorder %s96, %s98
      %p105 = scmp.eq.s32.totalorder %s25, 3
      %p106 = por %p104, %p105
      %p107 = scmp.ne.s32.totalorder %s98, %s99
      %p108 = scmp.eq.s32.totalorder %s25, 0
      %p109 = por %p107, %p108
      %p110 = scmp.ne.s32.totalorder %s98, %s99
      %p111 = scmp.eq.s32.totalorder %s26, 3
      %p112 = por %p110, %p111
      %p114 = scmp.ne.s32.totalorder %s99, %s113
      %p115 = scmp.eq.s32.totalorder %s26, 0
      %p116 = por %p114, %p115
      %s118 = sadd.s32 %s117, 1
      %p121 = scmp.eq.s32.totalorder %s20, 3
      %p122 = scmp.ne.s32.totalorder %s117, %s119
      %p123 = scmp.eq.s32.totalorder %s20, 0
      %p124 = por %p122, %p123
      %p125 = scmp.ne.s32.totalorder %s117, %s119
      %p126 = scmp.eq.s32.totalorder %s25, 3
      %p127 = por %p125, %p126
      %p128 = scmp.ne.s32.totalorder %s119, %s120
      %p129 = scmp.eq.s32.totalorder %s25, 0
      %p130 = por %p128, %p129
      %p131 = scmp.ne.s32.totalorder %s119, %s120
      %p132 = scmp.eq.s32.totalorder %s26, 3
      %p133 = por %p131, %p132
      %p135 = scmp.ne.s32.totalorder %s120, %s134
      %p136 = scmp.eq.s32.totalorder %s26, 0
      %p137 = por %p135, %p136
      %s138 = ssub.s32 %s20, %s27
      %p139 = scmp.eq.s32.totalorder %s138, 0
      %s141 = sadd.s32 %s140, 1
      %s142 = scalar_select %p139, %s140, %s141
      %p145 = pneg %p139
      %p146 = scmp.eq.s32.totalorder %s20, 3
      %p147 = por %p145, %p146
      %p148 = scmp.ne.s32.totalorder %s140, %s143
      %p149 = scmp.eq.s32.totalorder %s20, 0
      %p150 = por %p148, %p149
      %p151 = scmp.ne.s32.totalorder %s140, %s143
      %p152 = scmp.eq.s32.totalorder %s25, 3
      %p153 = por %p151, %p152
      %p154 = scmp.ne.s32.totalorder %s143, %s144
      %p155 = scmp.eq.s32.totalorder %s25, 0
      %p156 = por %p154, %p155
      %p157 = scmp.ne.s32.totalorder %s143, %s144
      %p158 = scmp.eq.s32.totalorder %s26, 3
      %p159 = por %p157, %p158
      %p161 = scmp.ne.s32.totalorder %s144, %s160
      %p162 = scmp.eq.s32.totalorder %s26, 0
      %p163 = por %p161, %p162
      %p164 = scmp.le.s32.totalorder 1, %s20
      %p165 = scmp.lt.s32.totalorder %s20, 5
      %p166 = pnand %p164, %p165
      %p167 = pneg %p166
      // Predicated region
      $region9: #{tpu_custom_call.1} parent=5 // pred_check
        _
      $region10: #{tpu_custom_call.1} parent=5 // pred_check_branch
        %169 = sbr.rel (%p166) target = $region12
      $region11: #{tpu_custom_call.1} parent=5 // pred_region
        %s170 = ssub.s32 %s20, 1
        // Predicated region
        $region13: #{tpu_custom_call.1} parent=11 // pred_check
          %p171 = pneg %p67
        $region14: #{tpu_custom_call.1} parent=11 // pred_check_branch
          %173 = sbr.rel (%p171) target = $region16
        $region15: #{tpu_custom_call.1} parent=11 // pred_region
          %s175 = ssub.s32 16384, 16384
          %176 = vsyncadd [#allocation8], %s175
          %s177 = sshll.u32 [#allocation7], 4
          %s178 = int_to_ptr.vmem [resolvable:$true] %s177
          %183 = dma.hbm_to_vmem [thread:$0]  %s2, 16384, %s178, [#allocation8], 256, 256, 16
        $region16: #{tpu_custom_call.1} parent=11 // pred_fallthru
          _
        // Predicated region
        $region17: #{tpu_custom_call.1} parent=11 // pred_check
          %p184 = pneg %p88
        $region18: #{tpu_custom_call.1} parent=11 // pred_check_branch
          %186 = sbr.rel (%p184) target = $region20
        $region19: #{tpu_custom_call.1} parent=11 // pred_region
          _
        $region20: #{tpu_custom_call.1} parent=11 // pred_fallthru
          _
        // Predicated region
        $region21: #{tpu_custom_call.1} parent=11 // pred_check
          %p187 = pneg %p109
        $region22: #{tpu_custom_call.1} parent=11 // pred_check_branch
          %189 = sbr.rel (%p187) target = $region24
        $region23: #{tpu_custom_call.1} parent=11 // pred_region
          %s191 = ssub.s32 4096, 4096
          %192 = vsyncadd [#allocation8], %s191
          %s193 = sshll.u32 [#allocation9], 4
          %s194 = int_to_ptr.vmem [resolvable:$true] %s193
          %199 = dma.hbm_to_vmem [thread:$0]  %s4, 4096, %s194, [#allocation8], 64, 64, 4
        $region24: #{tpu_custom_call.1} parent=11 // pred_fallthru
          _
        // Predicated region
        $region25: #{tpu_custom_call.1} parent=11 // pred_check
          %p200 = pneg %p130
        $region26: #{tpu_custom_call.1} parent=11 // pred_check_branch
          %202 = sbr.rel (%p200) target = $region28
        $region27: #{tpu_custom_call.1} parent=11 // pred_region
          _
        $region28: #{tpu_custom_call.1} parent=11 // pred_fallthru
          _
      $region12: #{tpu_custom_call.1} parent=5 // pred_fallthru
        _
      %p203 = scmp.lt.s32.totalorder %s20, 4
      // Predicated region
      $region29: #{tpu_custom_call.1} parent=5 // pred_check
        %p204 = pneg %p203
      $region30: #{tpu_custom_call.1} parent=5 // pred_check_branch
        %206 = sbr.rel (%p204) target = $region32
      $region31: #{tpu_custom_call.1} parent=5 // pred_region
        // Predicated region
        $region33: #{tpu_custom_call.1} parent=31 // pred_check
          %p207 = pneg %p40
        $region34: #{tpu_custom_call.1} parent=31 // pred_check_branch
          %209 = sbr.rel (%p207) target = $region36
        $region35: #{tpu_custom_call.1} parent=31 // pred_region
          %s210 = sand.u32 %s30, 1
          %s211 = scalar_lea.sflag [#allocation5], %s210
          %s212 = sand.u32 %s30, 1
          %s213 = smul.addr %s212, 16
          %s214 = scalar_lea.vmem [#allocation4], %s213
          %s216 = ssub.s32 256, 256
          %217 = vsyncadd %s211, %s216
          %s218 = smul.addr %s20, 4
          %s219 = smul.addr %s218, 64
          %s220 = scalar_lea.hbm %s1, %s219
          %s222 = sshll.u32 %s214, 4
          %s223 = int_to_ptr.vmem [resolvable:$true] %s222
          %225 = dma.hbm_to_vmem [thread:$0]  %s220, 256, %s223, %s211
        $region36: #{tpu_custom_call.1} parent=31 // pred_fallthru
          _
      $region32: #{tpu_custom_call.1} parent=5 // pred_fallthru
        _
      %p226 = scmp.le.s32.totalorder 1, %s20
      %p227 = scmp.lt.s32.totalorder %s20, 5
      %p228 = pnand %p226, %p227
      %p229 = pneg %p228
      // Predicated region
      $region37: #{tpu_custom_call.1} parent=5 // pred_check
        _
      $region38: #{tpu_custom_call.1} parent=5 // pred_check_branch
        %231 = sbr.rel (%p228) target = $region40
      $region39: #{tpu_custom_call.1} parent=5 // pred_region
        %s232 = ssub.s32 %s20, 1
        %s233 = sand.u32 %s33, 1
        %s234 = scalar_lea.sflag [#allocation5], %s233
        %s235 = sand.u32 %s33, 1
        %s236 = smul.addr %s235, 16
        %s237 = scalar_lea.vmem [#allocation4], %s236
        // Predicated region
        $region41: #{tpu_custom_call.1} parent=39 // pred_check
          %p238 = pneg %p46
        $region42: #{tpu_custom_call.1} parent=39 // pred_check_branch
          %240 = sbr.rel (%p238) target = $region44
        $region43: #{tpu_custom_call.1} parent=39 // pred_region
          %241 = dma.done %s234, 256
        $region44: #{tpu_custom_call.1} parent=39 // pred_fallthru
          _
        // Predicated region
        $region45: #{tpu_custom_call.1} parent=39 // pred_check
          %p242 = pneg %p67
        $region46: #{tpu_custom_call.1} parent=39 // pred_check_branch
          %244 = sbr.rel (%p242) target = $region48
        $region47: #{tpu_custom_call.1} parent=39 // pred_region
          %245 = dma.done [#allocation8], 16384
        $region48: #{tpu_custom_call.1} parent=39 // pred_fallthru
          _
        // Predicated region
        $region49: #{tpu_custom_call.1} parent=39 // pred_check
          %p246 = pneg %p109
        $region50: #{tpu_custom_call.1} parent=39 // pred_check_branch
          %248 = sbr.rel (%p246) target = $region52
        $region51: #{tpu_custom_call.1} parent=39 // pred_region
          %249 = dma.done [#allocation8], 4096
        $region52: #{tpu_custom_call.1} parent=39 // pred_fallthru
          _
        %s250 = sand.u32 %s33, 1
        %s251 = scalar_lea.sflag [#allocation5], %s250
        %s252 = sand.u32 %s33, 1
        %s253 = smul.addr %s252, 16
        %s254 = scalar_lea.vmem [#allocation4], %s253
        %p255 = pneg %p46
        %p256 = pneg %p43
        %p257 = pneg %p67
        %p258 = pneg %p64
        %p259 = pneg %p88
        %p260 = pneg %p85
        %p261 = pneg %p109
        %p262 = pneg %p106
        %p263 = pneg %p130
        %p264 = pneg %p127
        %p265 = pneg %p156
        %p266 = pneg %p153
        %s267 = sand.u32 %s143, 1
        %s268 = scalar_lea.sflag [#allocation6], %s267
        %s269 = sand.u32 %s143, 1
        %s270 = smul.addr %s269, 8
        %s271 = scalar_lea.vmem [#allocation10], %s270
        %v273 = vld [vmem:[%s237] sm:$0xff]
        %v274 = vld [vmem:[%s237 + $0x8] sm:$0xff]
        %v275 = vld [vmem:[#allocation7] sm:$0xff]
        %v276 = vld [vmem:[#allocation7 + $0x8] sm:$0xff]
        %v277 = vld [vmem:[#allocation7 + $0x10] sm:$0xff]
        %v278 = vld [vmem:[#allocation7 + $0x18] sm:$0xff]
        %v279 = vld [vmem:[#allocation7 + $0x20] sm:$0xff]
        %v280 = vld [vmem:[#allocation7 + $0x28] sm:$0xff]
        %v281 = vld [vmem:[#allocation7 + $0x30] sm:$0xff]
        %v282 = vld [vmem:[#allocation7 + $0x38] sm:$0xff]
        %v283 = vld [vmem:[#allocation7 + $0x40] sm:$0xff]
        %v284 = vld [vmem:[#allocation7 + $0x48] sm:$0xff]
        %v285 = vld [vmem:[#allocation7 + $0x50] sm:$0xff]
        %v286 = vld [vmem:[#allocation7 + $0x58] sm:$0xff]
        %v287 = vld [vmem:[#allocation7 + $0x60] sm:$0xff]
        %v288 = vld [vmem:[#allocation7 + $0x68] sm:$0xff]
        %v289 = vld [vmem:[#allocation7 + $0x70] sm:$0xff]
        %v290 = vld [vmem:[#allocation7 + $0x78] sm:$0xff]
        %v291 = vld [vmem:[#allocation7 + $0x80] sm:$0xff]
        %v292 = vld [vmem:[#allocation7 + $0x88] sm:$0xff]
        %v293 = vld [vmem:[#allocation7 + $0x90] sm:$0xff]
        %v294 = vld [vmem:[#allocation7 + $0x98] sm:$0xff]
        %v295 = vld [vmem:[#allocation7 + $0xa0] sm:$0xff]
        %v296 = vld [vmem:[#allocation7 + $0xa8] sm:$0xff]
        %v297 = vld [vmem:[#allocation7 + $0xb0] sm:$0xff]
        %v298 = vld [vmem:[#allocation7 + $0xb8] sm:$0xff]
        %v299 = vld [vmem:[#allocation7 + $0xc0] sm:$0xff]
        %v300 = vld [vmem:[#allocation7 + $0xc8] sm:$0xff]
        %v301 = vld [vmem:[#allocation7 + $0xd0] sm:$0xff]
        %v302 = vld [vmem:[#allocation7 + $0xd8] sm:$0xff]
        %v303 = vld [vmem:[#allocation7 + $0xe0] sm:$0xff]
        %v304 = vld [vmem:[#allocation7 + $0xe8] sm:$0xff]
        %v305 = vld [vmem:[#allocation7 + $0xf0] sm:$0xff]
        %v306 = vld [vmem:[#allocation7 + $0xf8] sm:$0xff]
        %v307 = vld [vmem:[#allocation7 + $0x100] sm:$0xff]
        %v308 = vld [vmem:[#allocation7 + $0x108] sm:$0xff]
        %v309 = vld [vmem:[#allocation7 + $0x110] sm:$0xff]
        %v310 = vld [vmem:[#allocation7 + $0x118] sm:$0xff]
        %v311 = vld [vmem:[#allocation7 + $0x120] sm:$0xff]
        %v312 = vld [vmem:[#allocation7 + $0x128] sm:$0xff]
        %v313 = vld [vmem:[#allocation7 + $0x130] sm:$0xff]
        %v314 = vld [vmem:[#allocation7 + $0x138] sm:$0xff]
        %v315 = vld [vmem:[#allocation7 + $0x140] sm:$0xff]
        %v316 = vld [vmem:[#allocation7 + $0x148] sm:$0xff]
        %v317 = vld [vmem:[#allocation7 + $0x150] sm:$0xff]
        %v318 = vld [vmem:[#allocation7 + $0x158] sm:$0xff]
        %v319 = vld [vmem:[#allocation7 + $0x160] sm:$0xff]
        %v320 = vld [vmem:[#allocation7 + $0x168] sm:$0xff]
        %v321 = vld [vmem:[#allocation7 + $0x170] sm:$0xff]
        %v322 = vld [vmem:[#allocation7 + $0x178] sm:$0xff]
        %v323 = vld [vmem:[#allocation7 + $0x180] sm:$0xff]
        %v324 = vld [vmem:[#allocation7 + $0x188] sm:$0xff]
        %v325 = vld [vmem:[#allocation7 + $0x190] sm:$0xff]
        %v326 = vld [vmem:[#allocation7 + $0x198] sm:$0xff]
        %v327 = vld [vmem:[#allocation7 + $0x1a0] sm:$0xff]
        %v328 = vld [vmem:[#allocation7 + $0x1a8] sm:$0xff]
        %v329 = vld [vmem:[#allocation7 + $0x1b0] sm:$0xff]
        %v330 = vld [vmem:[#allocation7 + $0x1b8] sm:$0xff]
        %v331 = vld [vmem:[#allocation7 + $0x1c0] sm:$0xff]
        %v332 = vld [vmem:[#allocation7 + $0x1c8] sm:$0xff]
        %v333 = vld [vmem:[#allocation7 + $0x1d0] sm:$0xff]
        %v334 = vld [vmem:[#allocation7 + $0x1d8] sm:$0xff]
        %v335 = vld [vmem:[#allocation7 + $0x1e0] sm:$0xff]
        %v336 = vld [vmem:[#allocation7 + $0x1e8] sm:$0xff]
        %v337 = vld [vmem:[#allocation7 + $0x1f0] sm:$0xff]
        %v338 = vld [vmem:[#allocation7 + $0x1f8] sm:$0xff]
        %v339 = vld [vmem:[#allocation7 + $0x200] sm:$0xff]
        %v340 = vld [vmem:[#allocation7 + $0x208] sm:$0xff]
        %v341 = vld [vmem:[#allocation7 + $0x210] sm:$0xff]
        %v342 = vld [vmem:[#allocation7 + $0x218] sm:$0xff]
        %v343 = vld [vmem:[#allocation7 + $0x220] sm:$0xff]
        %v344 = vld [vmem:[#allocation7 + $0x228] sm:$0xff]
        %v345 = vld [vmem:[#allocation7 + $0x230] sm:$0xff]
        %v346 = vld [vmem:[#allocation7 + $0x238] sm:$0xff]
        %v347 = vld [vmem:[#allocation7 + $0x240] sm:$0xff]
        %v348 = vld [vmem:[#allocation7 + $0x248] sm:$0xff]
        %v349 = vld [vmem:[#allocation7 + $0x250] sm:$0xff]
        %v350 = vld [vmem:[#allocation7 + $0x258] sm:$0xff]
        %v351 = vld [vmem:[#allocation7 + $0x260] sm:$0xff]
        %v352 = vld [vmem:[#allocation7 + $0x268] sm:$0xff]
        %v353 = vld [vmem:[#allocation7 + $0x270] sm:$0xff]
        %v354 = vld [vmem:[#allocation7 + $0x278] sm:$0xff]
        %v355 = vld [vmem:[#allocation7 + $0x280] sm:$0xff]
        %v356 = vld [vmem:[#allocation7 + $0x288] sm:$0xff]
        %v357 = vld [vmem:[#allocation7 + $0x290] sm:$0xff]
        %v358 = vld [vmem:[#allocation7 + $0x298] sm:$0xff]
        %v359 = vld [vmem:[#allocation7 + $0x2a0] sm:$0xff]
        %v360 = vld [vmem:[#allocation7 + $0x2a8] sm:$0xff]
        %v361 = vld [vmem:[#allocation7 + $0x2b0] sm:$0xff]
        %v362 = vld [vmem:[#allocation7 + $0x2b8] sm:$0xff]
        %v363 = vld [vmem:[#allocation7 + $0x2c0] sm:$0xff]
        %v364 = vld [vmem:[#allocation7 + $0x2c8] sm:$0xff]
        %v365 = vld [vmem:[#allocation7 + $0x2d0] sm:$0xff]
        %v366 = vld [vmem:[#allocation7 + $0x2d8] sm:$0xff]
        %v367 = vld [vmem:[#allocation7 + $0x2e0] sm:$0xff]
        %v368 = vld [vmem:[#allocation7 + $0x2e8] sm:$0xff]
        %v369 = vld [vmem:[#allocation7 + $0x2f0] sm:$0xff]
        %v370 = vld [vmem:[#allocation7 + $0x2f8] sm:$0xff]
        %v371 = vld [vmem:[#allocation7 + $0x300] sm:$0xff]
        %v372 = vld [vmem:[#allocation7 + $0x308] sm:$0xff]
        %v373 = vld [vmem:[#allocation7 + $0x310] sm:$0xff]
        %v374 = vld [vmem:[#allocation7 + $0x318] sm:$0xff]
        %v375 = vld [vmem:[#allocation7 + $0x320] sm:$0xff]
        %v376 = vld [vmem:[#allocation7 + $0x328] sm:$0xff]
        %v377 = vld [vmem:[#allocation7 + $0x330] sm:$0xff]
        %v378 = vld [vmem:[#allocation7 + $0x338] sm:$0xff]
        %v379 = vld [vmem:[#allocation7 + $0x340] sm:$0xff]
        %v380 = vld [vmem:[#allocation7 + $0x348] sm:$0xff]
        %v381 = vld [vmem:[#allocation7 + $0x350] sm:$0xff]
        %v382 = vld [vmem:[#allocation7 + $0x358] sm:$0xff]
        %v383 = vld [vmem:[#allocation7 + $0x360] sm:$0xff]
        %v384 = vld [vmem:[#allocation7 + $0x368] sm:$0xff]
        %v385 = vld [vmem:[#allocation7 + $0x370] sm:$0xff]
        %v386 = vld [vmem:[#allocation7 + $0x378] sm:$0xff]
        %v387 = vld [vmem:[#allocation7 + $0x380] sm:$0xff]
        %v388 = vld [vmem:[#allocation7 + $0x388] sm:$0xff]
        %v389 = vld [vmem:[#allocation7 + $0x390] sm:$0xff]
        %v390 = vld [vmem:[#allocation7 + $0x398] sm:$0xff]
        %v391 = vld [vmem:[#allocation7 + $0x3a0] sm:$0xff]
        %v392 = vld [vmem:[#allocation7 + $0x3a8] sm:$0xff]
        %v393 = vld [vmem:[#allocation7 + $0x3b0] sm:$0xff]
        %v394 = vld [vmem:[#allocation7 + $0x3b8] sm:$0xff]
        %v395 = vld [vmem:[#allocation7 + $0x3c0] sm:$0xff]
        %v396 = vld [vmem:[#allocation7 + $0x3c8] sm:$0xff]
        %v397 = vld [vmem:[#allocation7 + $0x3d0] sm:$0xff]
        %v398 = vld [vmem:[#allocation7 + $0x3d8] sm:$0xff]
        %v399 = vld [vmem:[#allocation7 + $0x3e0] sm:$0xff]
        %v400 = vld [vmem:[#allocation7 + $0x3e8] sm:$0xff]
        %v401 = vld [vmem:[#allocation7 + $0x3f0] sm:$0xff]
        %v402 = vld [vmem:[#allocation7 + $0x3f8] sm:$0xff]
        %v403 = vld [vmem:[%s3] sm:$0xf]
        %v405 = vlaneseq
        %v406 = vshrl.u32 %v405, 7
        %v407 = vsub.s32 0, %v406
        %v408 = vrot.slane %v403, %v407
        %v409 = vlaneseq
        %v410 = vshrl.u32 %v409, 7
        %v411 = vsub.s32 1, %v410
        %v412 = vrot.slane %v403, %v411
        %v413 = vlaneseq
        %v414 = vshrl.u32 %v413, 7
        %v415 = vsub.s32 2, %v414
        %v416 = vrot.slane %v403, %v415
        %v417 = vlaneseq
        %v418 = vshrl.u32 %v417, 7
        %v419 = vsub.s32 3, %v418
        %v420 = vrot.slane %v403, %v419
        %v427 = vunpack.c.l.b16 %v273
        %v428 = vunpack.c.h.b16 %v273
        %v429 = vunpack.c.l.b16 %v274
        %v430 = vunpack.c.h.b16 %v274
        %v431 = vpack.c.b16 %v427, %v427
        %v432 = vpack.c.b16 %v428, %v428
        %v433 = vpack.c.b16 %v429, %v429
        %v434 = vpack.c.b16 %v430, %v430
        %v567 = vunpack.c.l.b16 %v275
        %v568 = vunpack.c.h.b16 %v275
        %v569 = vunpack.c.l.b16 %v276
        %v570 = vunpack.c.h.b16 %v276
        %v571 = vunpack.c.l.b16 %v277
        %v572 = vunpack.c.h.b16 %v277
        %v573 = vunpack.c.l.b16 %v278
        %v574 = vunpack.c.h.b16 %v278
        %v575 = vunpack.c.l.b16 %v279
        %v576 = vunpack.c.h.b16 %v279
        %v577 = vunpack.c.l.b16 %v280
        %v578 = vunpack.c.h.b16 %v280
        %v579 = vunpack.c.l.b16 %v281
        %v580 = vunpack.c.h.b16 %v281
        %v581 = vunpack.c.l.b16 %v282
        %v582 = vunpack.c.h.b16 %v282
        %v583 = vunpack.c.l.b16 %v283
        %v584 = vunpack.c.h.b16 %v283
        %v585 = vunpack.c.l.b16 %v284
        %v586 = vunpack.c.h.b16 %v284
        %v587 = vunpack.c.l.b16 %v285
        %v588 = vunpack.c.h.b16 %v285
        %v589 = vunpack.c.l.b16 %v286
        %v590 = vunpack.c.h.b16 %v286
        %v591 = vunpack.c.l.b16 %v287
        %v592 = vunpack.c.h.b16 %v287
        %v593 = vunpack.c.l.b16 %v288
        %v594 = vunpack.c.h.b16 %v288
        %v595 = vunpack.c.l.b16 %v289
        %v596 = vunpack.c.h.b16 %v289
        %v597 = vunpack.c.l.b16 %v290
        %v598 = vunpack.c.h.b16 %v290
        %v599 = vunpack.c.l.b16 %v291
        %v600 = vunpack.c.h.b16 %v291
        %v601 = vunpack.c.l.b16 %v292
        %v602 = vunpack.c.h.b16 %v292
        %v603 = vunpack.c.l.b16 %v293
        %v604 = vunpack.c.h.b16 %v293
        %v605 = vunpack.c.l.b16 %v294
        %v606 = vunpack.c.h.b16 %v294
        %v607 = vunpack.c.l.b16 %v295
        %v608 = vunpack.c.h.b16 %v295
        %v609 = vunpack.c.l.b16 %v296
        %v610 = vunpack.c.h.b16 %v296
        %v611 = vunpack.c.l.b16 %v297
        %v612 = vunpack.c.h.b16 %v297
        %v613 = vunpack.c.l.b16 %v298
        %v614 = vunpack.c.h.b16 %v298
        %v615 = vunpack.c.l.b16 %v299
        %v616 = vunpack.c.h.b16 %v299
        %v617 = vunpack.c.l.b16 %v300
        %v618 = vunpack.c.h.b16 %v300
        %v619 = vunpack.c.l.b16 %v301
        %v620 = vunpack.c.h.b16 %v301
        %v621 = vunpack.c.l.b16 %v302
        %v622 = vunpack.c.h.b16 %v302
        %v623 = vunpack.c.l.b16 %v303
        %v624 = vunpack.c.h.b16 %v303
        %v625 = vunpack.c.l.b16 %v304
        %v626 = vunpack.c.h.b16 %v304
        %v627 = vunpack.c.l.b16 %v305
        %v628 = vunpack.c.h.b16 %v305
        %v629 = vunpack.c.l.b16 %v306
        %v630 = vunpack.c.h.b16 %v306
        %v631 = vunpack.c.l.b16 %v307
        %v632 = vunpack.c.h.b16 %v307
        %v633 = vunpack.c.l.b16 %v308
        %v634 = vunpack.c.h.b16 %v308
        %v635 = vunpack.c.l.b16 %v309
        %v636 = vunpack.c.h.b16 %v309
        %v637 = vunpack.c.l.b16 %v310
        %v638 = vunpack.c.h.b16 %v310
        %v639 = vunpack.c.l.b16 %v311
        %v640 = vunpack.c.h.b16 %v311
        %v641 = vunpack.c.l.b16 %v312
        %v642 = vunpack.c.h.b16 %v312
        %v643 = vunpack.c.l.b16 %v313
        %v644 = vunpack.c.h.b16 %v313
        %v645 = vunpack.c.l.b16 %v314
        %v646 = vunpack.c.h.b16 %v314
        %v647 = vunpack.c.l.b16 %v315
        %v648 = vunpack.c.h.b16 %v315
        %v649 = vunpack.c.l.b16 %v316
        %v650 = vunpack.c.h.b16 %v316
        %v651 = vunpack.c.l.b16 %v317
        %v652 = vunpack.c.h.b16 %v317
        %v653 = vunpack.c.l.b16 %v318
        %v654 = vunpack.c.h.b16 %v318
        %v655 = vunpack.c.l.b16 %v319
        %v656 = vunpack.c.h.b16 %v319
        %v657 = vunpack.c.l.b16 %v320
        %v658 = vunpack.c.h.b16 %v320
        %v659 = vunpack.c.l.b16 %v321
        %v660 = vunpack.c.h.b16 %v321
        %v661 = vunpack.c.l.b16 %v322
        %v662 = vunpack.c.h.b16 %v322
        %v663 = vunpack.c.l.b16 %v323
        %v664 = vunpack.c.h.b16 %v323
        %v665 = vunpack.c.l.b16 %v324
        %v666 = vunpack.c.h.b16 %v324
        %v667 = vunpack.c.l.b16 %v325
        %v668 = vunpack.c.h.b16 %v325
        %v669 = vunpack.c.l.b16 %v326
        %v670 = vunpack.c.h.b16 %v326
        %v671 = vunpack.c.l.b16 %v327
        %v672 = vunpack.c.h.b16 %v327
        %v673 = vunpack.c.l.b16 %v328
        %v674 = vunpack.c.h.b16 %v328
        %v675 = vunpack.c.l.b16 %v329
        %v676 = vunpack.c.h.b16 %v329
        %v677 = vunpack.c.l.b16 %v330
        %v678 = vunpack.c.h.b16 %v330
        %v679 = vunpack.c.l.b16 %v331
        %v680 = vunpack.c.h.b16 %v331
        %v681 = vunpack.c.l.b16 %v332
        %v682 = vunpack.c.h.b16 %v332
        %v683 = vunpack.c.l.b16 %v333
        %v684 = vunpack.c.h.b16 %v333
        %v685 = vunpack.c.l.b16 %v334
        %v686 = vunpack.c.h.b16 %v334
        %v687 = vunpack.c.l.b16 %v335
        %v688 = vunpack.c.h.b16 %v335
        %v689 = vunpack.c.l.b16 %v336
        %v690 = vunpack.c.h.b16 %v336
        %v691 = vunpack.c.l.b16 %v337
        %v692 = vunpack.c.h.b16 %v337
        %v693 = vunpack.c.l.b16 %v338
        %v694 = vunpack.c.h.b16 %v338
        %v695 = vunpack.c.l.b16 %v339
        %v696 = vunpack.c.h.b16 %v339
        %v697 = vunpack.c.l.b16 %v340
        %v698 = vunpack.c.h.b16 %v340
        %v699 = vunpack.c.l.b16 %v341
        %v700 = vunpack.c.h.b16 %v341
        %v701 = vunpack.c.l.b16 %v342
        %v702 = vunpack.c.h.b16 %v342
        %v703 = vunpack.c.l.b16 %v343
        %v704 = vunpack.c.h.b16 %v343
        %v705 = vunpack.c.l.b16 %v344
        %v706 = vunpack.c.h.b16 %v344
        %v707 = vunpack.c.l.b16 %v345
        %v708 = vunpack.c.h.b16 %v345
        %v709 = vunpack.c.l.b16 %v346
        %v710 = vunpack.c.h.b16 %v346
        %v711 = vunpack.c.l.b16 %v347
        %v712 = vunpack.c.h.b16 %v347
        %v713 = vunpack.c.l.b16 %v348
        %v714 = vunpack.c.h.b16 %v348
        %v715 = vunpack.c.l.b16 %v349
        %v716 = vunpack.c.h.b16 %v349
        %v717 = vunpack.c.l.b16 %v350
        %v718 = vunpack.c.h.b16 %v350
        %v719 = vunpack.c.l.b16 %v351
        %v720 = vunpack.c.h.b16 %v351
        %v721 = vunpack.c.l.b16 %v352
        %v722 = vunpack.c.h.b16 %v352
        %v723 = vunpack.c.l.b16 %v353
        %v724 = vunpack.c.h.b16 %v353
        %v725 = vunpack.c.l.b16 %v354
        %v726 = vunpack.c.h.b16 %v354
        %v727 = vunpack.c.l.b16 %v355
        %v728 = vunpack.c.h.b16 %v355
        %v729 = vunpack.c.l.b16 %v356
        %v730 = vunpack.c.h.b16 %v356
        %v731 = vunpack.c.l.b16 %v357
        %v732 = vunpack.c.h.b16 %v357
        %v733 = vunpack.c.l.b16 %v358
        %v734 = vunpack.c.h.b16 %v358
        %v735 = vunpack.c.l.b16 %v359
        %v736 = vunpack.c.h.b16 %v359
        %v737 = vunpack.c.l.b16 %v360
        %v738 = vunpack.c.h.b16 %v360
        %v739 = vunpack.c.l.b16 %v361
        %v740 = vunpack.c.h.b16 %v361
        %v741 = vunpack.c.l.b16 %v362
        %v742 = vunpack.c.h.b16 %v362
        %v743 = vunpack.c.l.b16 %v363
        %v744 = vunpack.c.h.b16 %v363
        %v745 = vunpack.c.l.b16 %v364
        %v746 = vunpack.c.h.b16 %v364
        %v747 = vunpack.c.l.b16 %v365
        %v748 = vunpack.c.h.b16 %v365
        %v749 = vunpack.c.l.b16 %v366
        %v750 = vunpack.c.h.b16 %v366
        %v751 = vunpack.c.l.b16 %v367
        %v752 = vunpack.c.h.b16 %v367
        %v753 = vunpack.c.l.b16 %v368
        %v754 = vunpack.c.h.b16 %v368
        %v755 = vunpack.c.l.b16 %v369
        %v756 = vunpack.c.h.b16 %v369
        %v757 = vunpack.c.l.b16 %v370
        %v758 = vunpack.c.h.b16 %v370
        %v759 = vunpack.c.l.b16 %v371
        %v760 = vunpack.c.h.b16 %v371
        %v761 = vunpack.c.l.b16 %v372
        %v762 = vunpack.c.h.b16 %v372
        %v763 = vunpack.c.l.b16 %v373
        %v764 = vunpack.c.h.b16 %v373
        %v765 = vunpack.c.l.b16 %v374
        %v766 = vunpack.c.h.b16 %v374
        %v767 = vunpack.c.l.b16 %v375
        %v768 = vunpack.c.h.b16 %v375
        %v769 = vunpack.c.l.b16 %v376
        %v770 = vunpack.c.h.b16 %v376
        %v771 = vunpack.c.l.b16 %v377
        %v772 = vunpack.c.h.b16 %v377
        %v773 = vunpack.c.l.b16 %v378
        %v774 = vunpack.c.h.b16 %v378
        %v775 = vunpack.c.l.b16 %v379
        %v776 = vunpack.c.h.b16 %v379
        %v777 = vunpack.c.l.b16 %v380
        %v778 = vunpack.c.h.b16 %v380
        %v779 = vunpack.c.l.b16 %v381
        %v780 = vunpack.c.h.b16 %v381
        %v781 = vunpack.c.l.b16 %v382
        %v782 = vunpack.c.h.b16 %v382
        %v783 = vunpack.c.l.b16 %v383
        %v784 = vunpack.c.h.b16 %v383
        %v785 = vunpack.c.l.b16 %v384
        %v786 = vunpack.c.h.b16 %v384
        %v787 = vunpack.c.l.b16 %v385
        %v788 = vunpack.c.h.b16 %v385
        %v789 = vunpack.c.l.b16 %v386
        %v790 = vunpack.c.h.b16 %v386
        %v791 = vunpack.c.l.b16 %v387
        %v792 = vunpack.c.h.b16 %v387
        %v793 = vunpack.c.l.b16 %v388
        %v794 = vunpack.c.h.b16 %v388
        %v795 = vunpack.c.l.b16 %v389
        %v796 = vunpack.c.h.b16 %v389
        %v797 = vunpack.c.l.b16 %v390
        %v798 = vunpack.c.h.b16 %v390
        %v799 = vunpack.c.l.b16 %v391
        %v800 = vunpack.c.h.b16 %v391
        %v801 = vunpack.c.l.b16 %v392
        %v802 = vunpack.c.h.b16 %v392
        %v803 = vunpack.c.l.b16 %v393
        %v804 = vunpack.c.h.b16 %v393
        %v805 = vunpack.c.l.b16 %v394
        %v806 = vunpack.c.h.b16 %v394
        %v807 = vunpack.c.l.b16 %v395
        %v808 = vunpack.c.h.b16 %v395
        %v809 = vunpack.c.l.b16 %v396
        %v810 = vunpack.c.h.b16 %v396
        %v811 = vunpack.c.l.b16 %v397
        %v812 = vunpack.c.h.b16 %v397
        %v813 = vunpack.c.l.b16 %v398
        %v814 = vunpack.c.h.b16 %v398
        %v815 = vunpack.c.l.b16 %v399
        %v816 = vunpack.c.h.b16 %v399
        %v817 = vunpack.c.l.b16 %v400
        %v818 = vunpack.c.h.b16 %v400
        %v819 = vunpack.c.l.b16 %v401
        %v820 = vunpack.c.h.b16 %v401
        %v821 = vunpack.c.l.b16 %v402
        %v822 = vunpack.c.h.b16 %v402
        %v823 = vpack.c.b16 %v571, %v567
        %v824 = vpack.c.b16 %v572, %v568
        %v825 = vpack.c.b16 %v573, %v569
        %v826 = vpack.c.b16 %v574, %v570
        %v827 = vpack.c.b16 %v579, %v575
        %v828 = vpack.c.b16 %v580, %v576
        %v829 = vpack.c.b16 %v581, %v577
        %v830 = vpack.c.b16 %v582, %v578
        %v831 = vpack.c.b16 %v587, %v583
        %v832 = vpack.c.b16 %v588, %v584
        %v833 = vpack.c.b16 %v589, %v585
        %v834 = vpack.c.b16 %v590, %v586
        %v835 = vpack.c.b16 %v595, %v591
        %v836 = vpack.c.b16 %v596, %v592
        %v837 = vpack.c.b16 %v597, %v593
        %v838 = vpack.c.b16 %v598, %v594
        %v839 = vpack.c.b16 %v603, %v599
        %v840 = vpack.c.b16 %v604, %v600
        %v841 = vpack.c.b16 %v605, %v601
        %v842 = vpack.c.b16 %v606, %v602
        %v843 = vpack.c.b16 %v611, %v607
        %v844 = vpack.c.b16 %v612, %v608
        %v845 = vpack.c.b16 %v613, %v609
        %v846 = vpack.c.b16 %v614, %v610
        %v847 = vpack.c.b16 %v619, %v615
        %v848 = vpack.c.b16 %v620, %v616
        %v849 = vpack.c.b16 %v621, %v617
        %v850 = vpack.c.b16 %v622, %v618
        %v851 = vpack.c.b16 %v627, %v623
        %v852 = vpack.c.b16 %v628, %v624
        %v853 = vpack.c.b16 %v629, %v625
        %v854 = vpack.c.b16 %v630, %v626
        %v855 = vpack.c.b16 %v635, %v631
        %v856 = vpack.c.b16 %v636, %v632
        %v857 = vpack.c.b16 %v637, %v633
        %v858 = vpack.c.b16 %v638, %v634
        %v859 = vpack.c.b16 %v643, %v639
        %v860 = vpack.c.b16 %v644, %v640
        %v861 = vpack.c.b16 %v645, %v641
        %v862 = vpack.c.b16 %v646, %v642
        %v863 = vpack.c.b16 %v651, %v647
        %v864 = vpack.c.b16 %v652, %v648
        %v865 = vpack.c.b16 %v653, %v649
        %v866 = vpack.c.b16 %v654, %v650
        %v867 = vpack.c.b16 %v659, %v655
        %v868 = vpack.c.b16 %v660, %v656
        %v869 = vpack.c.b16 %v661, %v657
        %v870 = vpack.c.b16 %v662, %v658
        %v871 = vpack.c.b16 %v667, %v663
        %v872 = vpack.c.b16 %v668, %v664
        %v873 = vpack.c.b16 %v669, %v665
        %v874 = vpack.c.b16 %v670, %v666
        %v875 = vpack.c.b16 %v675, %v671
        %v876 = vpack.c.b16 %v676, %v672
        %v877 = vpack.c.b16 %v677, %v673
        %v878 = vpack.c.b16 %v678, %v674
        %v879 = vpack.c.b16 %v683, %v679
        %v880 = vpack.c.b16 %v684, %v680
        %v881 = vpack.c.b16 %v685, %v681
        %v882 = vpack.c.b16 %v686, %v682
        %v883 = vpack.c.b16 %v691, %v687
        %v884 = vpack.c.b16 %v692, %v688
        %v885 = vpack.c.b16 %v693, %v689
        %v886 = vpack.c.b16 %v694, %v690
        %v887 = vpack.c.b16 %v699, %v695
        %v888 = vpack.c.b16 %v700, %v696
        %v889 = vpack.c.b16 %v701, %v697
        %v890 = vpack.c.b16 %v702, %v698
        %v891 = vpack.c.b16 %v707, %v703
        %v892 = vpack.c.b16 %v708, %v704
        %v893 = vpack.c.b16 %v709, %v705
        %v894 = vpack.c.b16 %v710, %v706
        %v895 = vpack.c.b16 %v715, %v711
        %v896 = vpack.c.b16 %v716, %v712
        %v897 = vpack.c.b16 %v717, %v713
        %v898 = vpack.c.b16 %v718, %v714
        %v899 = vpack.c.b16 %v723, %v719
        %v900 = vpack.c.b16 %v724, %v720
        %v901 = vpack.c.b16 %v725, %v721
        %v902 = vpack.c.b16 %v726, %v722
        %v903 = vpack.c.b16 %v731, %v727
        %v904 = vpack.c.b16 %v732, %v728
        %v905 = vpack.c.b16 %v733, %v729
        %v906 = vpack.c.b16 %v734, %v730
        %v907 = vpack.c.b16 %v739, %v735
        %v908 = vpack.c.b16 %v740, %v736
        %v909 = vpack.c.b16 %v741, %v737
        %v910 = vpack.c.b16 %v742, %v738
        %v911 = vpack.c.b16 %v747, %v743
        %v912 = vpack.c.b16 %v748, %v744
        %v913 = vpack.c.b16 %v749, %v745
        %v914 = vpack.c.b16 %v750, %v746
        %v915 = vpack.c.b16 %v755, %v751
        %v916 = vpack.c.b16 %v756, %v752
        %v917 = vpack.c.b16 %v757, %v753
        %v918 = vpack.c.b16 %v758, %v754
        %v919 = vpack.c.b16 %v763, %v759
        %v920 = vpack.c.b16 %v764, %v760
        %v921 = vpack.c.b16 %v765, %v761
        %v922 = vpack.c.b16 %v766, %v762
        %v923 = vpack.c.b16 %v771, %v767
        %v924 = vpack.c.b16 %v772, %v768
        %v925 = vpack.c.b16 %v773, %v769
        %v926 = vpack.c.b16 %v774, %v770
        %v927 = vpack.c.b16 %v779, %v775
        %v928 = vpack.c.b16 %v780, %v776
        %v929 = vpack.c.b16 %v781, %v777
        %v930 = vpack.c.b16 %v782, %v778
        %v931 = vpack.c.b16 %v787, %v783
        %v932 = vpack.c.b16 %v788, %v784
        %v933 = vpack.c.b16 %v789, %v785
        %v934 = vpack.c.b16 %v790, %v786
        %v935 = vpack.c.b16 %v795, %v791
        %v936 = vpack.c.b16 %v796, %v792
        %v937 = vpack.c.b16 %v797, %v793
        %v938 = vpack.c.b16 %v798, %v794
        %v939 = vpack.c.b16 %v803, %v799
        %v940 = vpack.c.b16 %v804, %v800
        %v941 = vpack.c.b16 %v805, %v801
        %v942 = vpack.c.b16 %v806, %v802
        %v943 = vpack.c.b16 %v811, %v807
        %v944 = vpack.c.b16 %v812, %v808
        %v945 = vpack.c.b16 %v813, %v809
        %v946 = vpack.c.b16 %v814, %v810
        %v947 = vpack.c.b16 %v819, %v815
        %v948 = vpack.c.b16 %v820, %v816
        %v949 = vpack.c.b16 %v821, %v817
        %v950 = vpack.c.b16 %v822, %v818
        %1079 = vmatprep.subr.bf16.mxu0 %v852
        %1080 = vmatpush1.bf16.msra.mxu0 %v851
        %1081 = vmatprep.subr.bf16.mxu0 %v848
        %1082 = vmatpush1.bf16.msra.mxu0 %v847
        %1083 = vmatprep.subr.bf16.mxu0 %v844
        %1084 = vmatpush1.bf16.msra.mxu0 %v843
        %1085 = vmatprep.subr.bf16.mxu0 %v840
        %1086 = vmatpush1.bf16.msra.mxu0 %v839
        %1087 = vmatprep.subr.bf16.mxu0 %v836
        %1088 = vmatpush1.bf16.msra.mxu0 %v835
        %1089 = vmatprep.subr.bf16.mxu0 %v832
        %1090 = vmatpush1.bf16.msra.mxu0 %v831
        %1091 = vmatprep.subr.bf16.mxu0 %v828
        %1092 = vmatpush1.bf16.msra.mxu0 %v827
        %1093 = vmatprep.subr.bf16.mxu0 %v824
        %1094 = vmatpush1.bf16.msra.mxu0 %v823
        %1095 = vmatprep.subr.bf16.mxu0 %v884
        %1096 = vmatpush2.bf16.msra.mxu0 %v883
        %1097 = vmatprep.subr.bf16.mxu0 %v880
        %1098 = vmatpush2.bf16.msra.mxu0 %v879
        %1099 = vmatprep.subr.bf16.mxu0 %v876
        %1100 = vmatpush2.bf16.msra.mxu0 %v875
        %1101 = vmatprep.subr.bf16.mxu0 %v872
        %1102 = vmatpush2.bf16.msra.mxu0 %v871
        %1103 = vmatprep.subr.bf16.mxu0 %v868
        %1104 = vmatpush2.bf16.msra.mxu0 %v867
        %1105 = vmatprep.subr.bf16.mxu0 %v864
        %1106 = vmatpush2.bf16.msra.mxu0 %v863
        %1107 = vmatprep.subr.bf16.mxu0 %v860
        %1108 = vmatpush2.bf16.msra.mxu0 %v859
        %1109 = vmatprep.subr.bf16.mxu0 %v856
        %1110 = vmatpush2.bf16.msra.mxu0 %v855
        %1111 = vmatprep.mubr.bf16.mxu0 %v432
        %1112 = vmatmul.mubr.bf16.gmra.mxu0 %v431
        %v1113 = vpop.f32.mrf.mxu0
        %v1114 = vadd.f32 %v408, %v1113
        %v1115 = vpop.f32.mrf.mxu0
        %v1116 = vadd.f32 %v412, %v1115
        %v1117 = vpop.f32.mrf.mxu0
        %v1118 = vpop.f32.mrf.mxu0
        %1119 = vdwg.mxu0
        %1120 = vmatprep.subr.bf16.mxu0 %v916
        %1121 = vmatpush1.bf16.msra.mxu0 %v915
        %1122 = vmatprep.subr.bf16.mxu0 %v912
        %1123 = vmatpush1.bf16.msra.mxu0 %v911
        %1124 = vmatprep.subr.bf16.mxu0 %v908
        %1125 = vmatpush1.bf16.msra.mxu0 %v907
        %1126 = vmatprep.subr.bf16.mxu0 %v904
        %1127 = vmatpush1.bf16.msra.mxu0 %v903
        %1128 = vmatprep.subr.bf16.mxu0 %v900
        %1129 = vmatpush1.bf16.msra.mxu0 %v899
        %1130 = vmatprep.subr.bf16.mxu0 %v896
        %1131 = vmatpush1.bf16.msra.mxu0 %v895
        %1132 = vmatprep.subr.bf16.mxu0 %v892
        %1133 = vmatpush1.bf16.msra.mxu0 %v891
        %1134 = vmatprep.subr.bf16.mxu0 %v888
        %1135 = vmatpush1.bf16.msra.mxu0 %v887
        %1136 = vmatprep.subr.bf16.mxu0 %v948
        %1137 = vmatpush2.bf16.msra.mxu0 %v947
        %1138 = vmatprep.subr.bf16.mxu0 %v944
        %1139 = vmatpush2.bf16.msra.mxu0 %v943
        %1140 = vmatprep.subr.bf16.mxu0 %v940
        %1141 = vmatpush2.bf16.msra.mxu0 %v939
        %1142 = vmatprep.subr.bf16.mxu0 %v936
        %1143 = vmatpush2.bf16.msra.mxu0 %v935
        %1144 = vmatprep.subr.bf16.mxu0 %v932
        %1145 = vmatpush2.bf16.msra.mxu0 %v931
        %1146 = vmatprep.subr.bf16.mxu0 %v928
        %1147 = vmatpush2.bf16.msra.mxu0 %v927
        %1148 = vmatprep.subr.bf16.mxu0 %v924
        %1149 = vmatpush2.bf16.msra.mxu0 %v923
        %1150 = vmatprep.subr.bf16.mxu0 %v920
        %1151 = vmatpush2.bf16.msra.mxu0 %v919
        %1152 = vmatprep.mubr.bf16.mxu0 %v434
        %1153 = vmatmul.mubr.bf16.gmra.mxu0 %v433
        %v1154 = vpop.f32.mrf.mxu0
        %v1155 = vadd.f32 %v1114, %v1154
        %v1156 = vpop.f32.mrf.mxu0
        %v1157 = vadd.f32 %v1116, %v1156
        %v1158 = vpop.f32.mrf.mxu0
        %v1159 = vpop.f32.mrf.mxu0
        %1160 = vdwg.mxu0
        %1161 = vmatprep.subr.bf16.mxu0 %v854
        %1162 = vmatpush1.bf16.msra.mxu0 %v853
        %1163 = vmatprep.subr.bf16.mxu0 %v850
        %1164 = vmatpush1.bf16.msra.mxu0 %v849
        %1165 = vmatprep.subr.bf16.mxu0 %v846
        %1166 = vmatpush1.bf16.msra.mxu0 %v845
        %1167 = vmatprep.subr.bf16.mxu0 %v842
        %1168 = vmatpush1.bf16.msra.mxu0 %v841
        %1169 = vmatprep.subr.bf16.mxu0 %v838
        %1170 = vmatpush1.bf16.msra.mxu0 %v837
        %1171 = vmatprep.subr.bf16.mxu0 %v834
        %1172 = vmatpush1.bf16.msra.mxu0 %v833
        %1173 = vmatprep.subr.bf16.mxu0 %v830
        %1174 = vmatpush1.bf16.msra.mxu0 %v829
        %1175 = vmatprep.subr.bf16.mxu0 %v826
        %1176 = vmatpush1.bf16.msra.mxu0 %v825
        %1177 = vmatprep.subr.bf16.mxu0 %v886
        %1178 = vmatpush2.bf16.msra.mxu0 %v885
        %1179 = vmatprep.subr.bf16.mxu0 %v882
        %1180 = vmatpush2.bf16.msra.mxu0 %v881
        %1181 = vmatprep.subr.bf16.mxu0 %v878
        %1182 = vmatpush2.bf16.msra.mxu0 %v877
        %1183 = vmatprep.subr.bf16.mxu0 %v874
        %1184 = vmatpush2.bf16.msra.mxu0 %v873
        %1185 = vmatprep.subr.bf16.mxu0 %v870
        %1186 = vmatpush2.bf16.msra.mxu0 %v869
        %1187 = vmatprep.subr.bf16.mxu0 %v866
        %1188 = vmatpush2.bf16.msra.mxu0 %v865
        %1189 = vmatprep.subr.bf16.mxu0 %v862
        %1190 = vmatpush2.bf16.msra.mxu0 %v861
        %1191 = vmatprep.subr.bf16.mxu0 %v858
        %1192 = vmatpush2.bf16.msra.mxu0 %v857
        %1193 = vmatprep.mubr.bf16.mxu0 %v432
        %1194 = vmatmul.mubr.bf16.gmra.mxu0 %v431
        %v1195 = vpop.f32.mrf.mxu0
        %v1196 = vadd.f32 %v416, %v1195
        %v1197 = vpop.f32.mrf.mxu0
        %v1198 = vadd.f32 %v420, %v1197
        %v1199 = vpop.f32.mrf.mxu0
        %v1200 = vpop.f32.mrf.mxu0
        %1201 = vdwg.mxu0
        %1202 = vmatprep.subr.bf16.mxu0 %v918
        %1203 = vmatpush1.bf16.msra.mxu0 %v917
        %1204 = vmatprep.subr.bf16.mxu0 %v914
        %1205 = vmatpush1.bf16.msra.mxu0 %v913
        %1206 = vmatprep.subr.bf16.mxu0 %v910
        %1207 = vmatpush1.bf16.msra.mxu0 %v909
        %1208 = vmatprep.subr.bf16.mxu0 %v906
        %1209 = vmatpush1.bf16.msra.mxu0 %v905
        %1210 = vmatprep.subr.bf16.mxu0 %v902
        %1211 = vmatpush1.bf16.msra.mxu0 %v901
        %1212 = vmatprep.subr.bf16.mxu0 %v898
        %1213 = vmatpush1.bf16.msra.mxu0 %v897
        %1214 = vmatprep.subr.bf16.mxu0 %v894
        %1215 = vmatpush1.bf16.msra.mxu0 %v893
        %1216 = vmatprep.subr.bf16.mxu0 %v890
        %1217 = vmatpush1.bf16.msra.mxu0 %v889
        %1218 = vmatprep.subr.bf16.mxu0 %v950
        %1219 = vmatpush2.bf16.msra.mxu0 %v949
        %1220 = vmatprep.subr.bf16.mxu0 %v946
        %1221 = vmatpush2.bf16.msra.mxu0 %v945
        %1222 = vmatprep.subr.bf16.mxu0 %v942
        %1223 = vmatpush2.bf16.msra.mxu0 %v941
        %1224 = vmatprep.subr.bf16.mxu0 %v938
        %1225 = vmatpush2.bf16.msra.mxu0 %v937
        %1226 = vmatprep.subr.bf16.mxu0 %v934
        %1227 = vmatpush2.bf16.msra.mxu0 %v933
        %1228 = vmatprep.subr.bf16.mxu0 %v930
        %1229 = vmatpush2.bf16.msra.mxu0 %v929
        %1230 = vmatprep.subr.bf16.mxu0 %v926
        %1231 = vmatpush2.bf16.msra.mxu0 %v925
        %1232 = vmatprep.subr.bf16.mxu0 %v922
        %1233 = vmatpush2.bf16.msra.mxu0 %v921
        %1234 = vmatprep.mubr.bf16.mxu0 %v434
        %1235 = vmatmul.mubr.bf16.gmra.mxu0 %v433
        %v1236 = vpop.f32.mrf.mxu0
        %v1237 = vadd.f32 %v1196, %v1236
        %v1238 = vpop.f32.mrf.mxu0
        %v1239 = vadd.f32 %v1198, %v1238
        %v1240 = vpop.f32.mrf.mxu0
        %v1241 = vpop.f32.mrf.mxu0
        %1242 = vdwg.mxu0
        %v1243 = vlaneseq
        %v1244 = vshrl.u32 %v1243, 7
        %v1245 = vlaneseq
        %v1246 = vand.u32 %v1245, 127
        %v1247 = vadd.s32 %v1246, 128
        %v1248 = vadd.s32 %v1246, 256
        %v1249 = vadd.s32 %v1246, 384
        %s1250 = smul.u32 %s25, 8
        %v1251 = vstv %s1250
        %v1252 = vadd.s32 %v1244, %v1251
        %v1253 = vmul.u32 %v1252, 512
        %v1254 = vadd.s32 %v1253, %v1246
        %v1255 = vadd.s32 %v1253, %v1247
        %v1256 = vadd.s32 %v1253, %v1248
        %v1257 = vadd.s32 %v1253, %v1249
        %s1258 = sld [smem:[#allocation3]]
        %s1259 = smul.u32 %s1258, 2654435769
        %v1260 = vstv %s1259
        %v1261 = vadd.s32 %v1254, %v1260
        %v1262 = vadd.s32 %v1255, %v1260
        %v1263 = vadd.s32 %v1256, %v1260
        %v1264 = vadd.s32 %v1257, %v1260
        %v1265 = vshrl.u32 %v1261, 16
        %v1266 = vshrl.u32 %v1262, 16
        %v1267 = vshrl.u32 %v1263, 16
        %v1268 = vshrl.u32 %v1264, 16
        %v1269 = vxor.u32 %v1261, %v1265
        %v1270 = vxor.u32 %v1262, %v1266
        %v1271 = vxor.u32 %v1263, %v1267
        %v1272 = vxor.u32 %v1264, %v1268
        %v1273 = vmul.u32 %v1269, 2246822507
        %v1274 = vmul.u32 %v1270, 2246822507
        %v1275 = vmul.u32 %v1271, 2246822507
        %v1276 = vmul.u32 %v1272, 2246822507
        %v1277 = vshrl.u32 %v1273, 13
        %v1278 = vshrl.u32 %v1274, 13
        %v1279 = vshrl.u32 %v1275, 13
        %v1280 = vshrl.u32 %v1276, 13
        %v1281 = vxor.u32 %v1273, %v1277
        %v1282 = vxor.u32 %v1274, %v1278
        %v1283 = vxor.u32 %v1275, %v1279
        %v1284 = vxor.u32 %v1276, %v1280
        %v1285 = vmul.u32 %v1281, 3266489909
        %v1286 = vmul.u32 %v1282, 3266489909
        %v1287 = vmul.u32 %v1283, 3266489909
        %v1288 = vmul.u32 %v1284, 3266489909
        %v1289 = vshrl.u32 %v1285, 16
        %v1290 = vshrl.u32 %v1286, 16
        %v1291 = vshrl.u32 %v1287, 16
        %v1292 = vshrl.u32 %v1288, 16
        %v1293 = vxor.u32 %v1285, %v1289
        %v1294 = vxor.u32 %v1286, %v1290
        %v1295 = vxor.u32 %v1287, %v1291
        %v1296 = vxor.u32 %v1288, %v1292
        %v1297 = vand.u32 %v1293, 2147483648
        %v1298 = vand.u32 %v1294, 2147483648
        %v1299 = vand.u32 %v1295, 2147483648
        %v1300 = vand.u32 %v1296, 2147483648
        %vm1301 = vcmp.eq.s32.totalorder %v1297, 0
        %vm1302 = vcmp.eq.s32.totalorder %v1298, 0
        %vm1303 = vcmp.eq.s32.totalorder %v1299, 0
        %vm1304 = vcmp.eq.s32.totalorder %v1300, 0
        %vm1305 = vcmp.gt.f32.partialorder %v1155, 0.0
        %vm1306 = vcmp.gt.f32.partialorder %v1157, 0.0
        %vm1307 = vcmp.gt.f32.partialorder %v1237, 0.0
        %vm1308 = vcmp.gt.f32.partialorder %v1239, 0.0
        %vm1309 = vmand %vm1301, %vm1305
        %vm1310 = vmand %vm1302, %vm1306
        %vm1311 = vmand %vm1303, %vm1307
        %vm1312 = vmand %vm1304, %vm1308
        %v1313 = vmul.f32 %v1155, 2.0
        %v1314 = vmul.f32 %v1157, 2.0
        %v1315 = vmul.f32 %v1237, 2.0
        %v1316 = vmul.f32 %v1239, 2.0
        %v1317 = vsel %vm1309, %v1313, 0.0
        %v1318 = vsel %vm1310, %v1314, 0.0
        %v1319 = vsel %vm1311, %v1315, 0.0
        %v1320 = vsel %vm1312, %v1316, 0.0
        %v1321 = vpack.c.bf16 %v1317, %v1317
        %v1322 = vpack.c.bf16 %v1318, %v1318
        %v1323 = vpack.c.bf16 %v1319, %v1319
        %v1324 = vpack.c.bf16 %v1320, %v1320
        %v1325 = vld [vmem:[#allocation9] sm:$0xf]
        %v1326 = vld [vmem:[#allocation9 + $0x4] sm:$0xf]
        %v1327 = vld [vmem:[#allocation9 + $0x8] sm:$0xf]
        %v1328 = vld [vmem:[#allocation9 + $0xc] sm:$0xf]
        %v1329 = vld [vmem:[#allocation9 + $0x10] sm:$0xf]
        %v1330 = vld [vmem:[#allocation9 + $0x14] sm:$0xf]
        %v1331 = vld [vmem:[#allocation9 + $0x18] sm:$0xf]
        %v1332 = vld [vmem:[#allocation9 + $0x1c] sm:$0xf]
        %v1333 = vld [vmem:[#allocation9 + $0x20] sm:$0xf]
        %v1334 = vld [vmem:[#allocation9 + $0x24] sm:$0xf]
        %v1335 = vld [vmem:[#allocation9 + $0x28] sm:$0xf]
        %v1336 = vld [vmem:[#allocation9 + $0x2c] sm:$0xf]
        %v1337 = vld [vmem:[#allocation9 + $0x30] sm:$0xf]
        %v1338 = vld [vmem:[#allocation9 + $0x34] sm:$0xf]
        %v1339 = vld [vmem:[#allocation9 + $0x38] sm:$0xf]
        %v1340 = vld [vmem:[#allocation9 + $0x3c] sm:$0xf]
        %v1341 = vld [vmem:[#allocation9 + $0x40] sm:$0xf]
        %v1342 = vld [vmem:[#allocation9 + $0x44] sm:$0xf]
        %v1343 = vld [vmem:[#allocation9 + $0x48] sm:$0xf]
        %v1344 = vld [vmem:[#allocation9 + $0x4c] sm:$0xf]
        %v1345 = vld [vmem:[#allocation9 + $0x50] sm:$0xf]
        %v1346 = vld [vmem:[#allocation9 + $0x54] sm:$0xf]
        %v1347 = vld [vmem:[#allocation9 + $0x58] sm:$0xf]
        %v1348 = vld [vmem:[#allocation9 + $0x5c] sm:$0xf]
        %v1349 = vld [vmem:[#allocation9 + $0x60] sm:$0xf]
        %v1350 = vld [vmem:[#allocation9 + $0x64] sm:$0xf]
        %v1351 = vld [vmem:[#allocation9 + $0x68] sm:$0xf]
        %v1352 = vld [vmem:[#allocation9 + $0x6c] sm:$0xf]
        %v1353 = vld [vmem:[#allocation9 + $0x70] sm:$0xf]
        %v1354 = vld [vmem:[#allocation9 + $0x74] sm:$0xf]
        %v1355 = vld [vmem:[#allocation9 + $0x78] sm:$0xf]
        %v1356 = vld [vmem:[#allocation9 + $0x7c] sm:$0xf]
        %v1357 = vld [vmem:[#allocation9 + $0x80] sm:$0xf]
        %v1358 = vld [vmem:[#allocation9 + $0x84] sm:$0xf]
        %v1359 = vld [vmem:[#allocation9 + $0x88] sm:$0xf]
        %v1360 = vld [vmem:[#allocation9 + $0x8c] sm:$0xf]
        %v1361 = vld [vmem:[#allocation9 + $0x90] sm:$0xf]
        %v1362 = vld [vmem:[#allocation9 + $0x94] sm:$0xf]
        %v1363 = vld [vmem:[#allocation9 + $0x98] sm:$0xf]
        %v1364 = vld [vmem:[#allocation9 + $0x9c] sm:$0xf]
        %v1365 = vld [vmem:[#allocation9 + $0xa0] sm:$0xf]
        %v1366 = vld [vmem:[#allocation9 + $0xa4] sm:$0xf]
        %v1367 = vld [vmem:[#allocation9 + $0xa8] sm:$0xf]
        %v1368 = vld [vmem:[#allocation9 + $0xac] sm:$0xf]
        %v1369 = vld [vmem:[#allocation9 + $0xb0] sm:$0xf]
        %v1370 = vld [vmem:[#allocation9 + $0xb4] sm:$0xf]
        %v1371 = vld [vmem:[#allocation9 + $0xb8] sm:$0xf]
        %v1372 = vld [vmem:[#allocation9 + $0xbc] sm:$0xf]
        %v1373 = vld [vmem:[#allocation9 + $0xc0] sm:$0xf]
        %v1374 = vld [vmem:[#allocation9 + $0xc4] sm:$0xf]
        %v1375 = vld [vmem:[#allocation9 + $0xc8] sm:$0xf]
        %v1376 = vld [vmem:[#allocation9 + $0xcc] sm:$0xf]
        %v1377 = vld [vmem:[#allocation9 + $0xd0] sm:$0xf]
        %v1378 = vld [vmem:[#allocation9 + $0xd4] sm:$0xf]
        %v1379 = vld [vmem:[#allocation9 + $0xd8] sm:$0xf]
        %v1380 = vld [vmem:[#allocation9 + $0xdc] sm:$0xf]
        %v1381 = vld [vmem:[#allocation9 + $0xe0] sm:$0xf]
        %v1382 = vld [vmem:[#allocation9 + $0xe4] sm:$0xf]
        %v1383 = vld [vmem:[#allocation9 + $0xe8] sm:$0xf]
        %v1384 = vld [vmem:[#allocation9 + $0xec] sm:$0xf]
        %v1385 = vld [vmem:[#allocation9 + $0xf0] sm:$0xf]
        %v1386 = vld [vmem:[#allocation9 + $0xf4] sm:$0xf]
        %v1387 = vld [vmem:[#allocation9 + $0xf8] sm:$0xf]
        %v1388 = vld [vmem:[#allocation9 + $0xfc] sm:$0xf]
        %v1389 = vld [vmem:[%s5] sm:$0x1]
        %v1391 = vlaneseq
        %v1392 = vshrl.u32 %v1391, 7
        %v1393 = vsub.s32 0, %v1392
        %v1394 = vrot.slane %v1389, %v1393
        %v1460 = vunpack.c.l.b16 %v1325
        %v1461 = vunpack.c.l.b16 %v1326
        %v1462 = vunpack.c.l.b16 %v1327
        %v1463 = vunpack.c.l.b16 %v1328
        %v1464 = vunpack.c.l.b16 %v1329
        %v1465 = vunpack.c.l.b16 %v1330
        %v1466 = vunpack.c.l.b16 %v1331
        %v1467 = vunpack.c.l.b16 %v1332
        %v1468 = vunpack.c.l.b16 %v1333
        %v1469 = vunpack.c.l.b16 %v1334
        %v1470 = vunpack.c.l.b16 %v1335
        %v1471 = vunpack.c.l.b16 %v1336
        %v1472 = vunpack.c.l.b16 %v1337
        %v1473 = vunpack.c.l.b16 %v1338
        %v1474 = vunpack.c.l.b16 %v1339
        %v1475 = vunpack.c.l.b16 %v1340
        %v1476 = vunpack.c.l.b16 %v1341
        %v1477 = vunpack.c.l.b16 %v1342
        %v1478 = vunpack.c.l.b16 %v1343
        %v1479 = vunpack.c.l.b16 %v1344
        %v1480 = vunpack.c.l.b16 %v1345
        %v1481 = vunpack.c.l.b16 %v1346
        %v1482 = vunpack.c.l.b16 %v1347
        %v1483 = vunpack.c.l.b16 %v1348
        %v1484 = vunpack.c.l.b16 %v1349
        %v1485 = vunpack.c.l.b16 %v1350
        %v1486 = vunpack.c.l.b16 %v1351
        %v1487 = vunpack.c.l.b16 %v1352
        %v1488 = vunpack.c.l.b16 %v1353
        %v1489 = vunpack.c.l.b16 %v1354
        %v1490 = vunpack.c.l.b16 %v1355
        %v1491 = vunpack.c.l.b16 %v1356
        %v1492 = vunpack.c.l.b16 %v1357
        %v1493 = vunpack.c.l.b16 %v1358
        %v1494 = vunpack.c.l.b16 %v1359
        %v1495 = vunpack.c.l.b16 %v1360
        %v1496 = vunpack.c.l.b16 %v1361
        %v1497 = vunpack.c.l.b16 %v1362
        %v1498 = vunpack.c.l.b16 %v1363
        %v1499 = vunpack.c.l.b16 %v1364
        %v1500 = vunpack.c.l.b16 %v1365
        %v1501 = vunpack.c.l.b16 %v1366
        %v1502 = vunpack.c.l.b16 %v1367
        %v1503 = vunpack.c.l.b16 %v1368
        %v1504 = vunpack.c.l.b16 %v1369
        %v1505 = vunpack.c.l.b16 %v1370
        %v1506 = vunpack.c.l.b16 %v1371
        %v1507 = vunpack.c.l.b16 %v1372
        %v1508 = vunpack.c.l.b16 %v1373
        %v1509 = vunpack.c.l.b16 %v1374
        %v1510 = vunpack.c.l.b16 %v1375
        %v1511 = vunpack.c.l.b16 %v1376
        %v1512 = vunpack.c.l.b16 %v1377
        %v1513 = vunpack.c.l.b16 %v1378
        %v1514 = vunpack.c.l.b16 %v1379
        %v1515 = vunpack.c.l.b16 %v1380
        %v1516 = vunpack.c.l.b16 %v1381
        %v1517 = vunpack.c.l.b16 %v1382
        %v1518 = vunpack.c.l.b16 %v1383
        %v1519 = vunpack.c.l.b16 %v1384
        %v1520 = vunpack.c.l.b16 %v1385
        %v1521 = vunpack.c.l.b16 %v1386
        %v1522 = vunpack.c.l.b16 %v1387
        %v1523 = vunpack.c.l.b16 %v1388
        %v1524 = vpack.c.b16 %v1461, %v1460
        %v1525 = vpack.c.b16 %v1463, %v1462
        %v1526 = vpack.c.b16 %v1465, %v1464
        %v1527 = vpack.c.b16 %v1467, %v1466
        %v1528 = vpack.c.b16 %v1469, %v1468
        %v1529 = vpack.c.b16 %v1471, %v1470
        %v1530 = vpack.c.b16 %v1473, %v1472
        %v1531 = vpack.c.b16 %v1475, %v1474
        %v1532 = vpack.c.b16 %v1477, %v1476
        %v1533 = vpack.c.b16 %v1479, %v1478
        %v1534 = vpack.c.b16 %v1481, %v1480
        %v1535 = vpack.c.b16 %v1483, %v1482
        %v1536 = vpack.c.b16 %v1485, %v1484
        %v1537 = vpack.c.b16 %v1487, %v1486
        %v1538 = vpack.c.b16 %v1489, %v1488
        %v1539 = vpack.c.b16 %v1491, %v1490
        %v1540 = vpack.c.b16 %v1493, %v1492
        %v1541 = vpack.c.b16 %v1495, %v1494
        %v1542 = vpack.c.b16 %v1497, %v1496
        %v1543 = vpack.c.b16 %v1499, %v1498
        %v1544 = vpack.c.b16 %v1501, %v1500
        %v1545 = vpack.c.b16 %v1503, %v1502
        %v1546 = vpack.c.b16 %v1505, %v1504
        %v1547 = vpack.c.b16 %v1507, %v1506
        %v1548 = vpack.c.b16 %v1509, %v1508
        %v1549 = vpack.c.b16 %v1511, %v1510
        %v1550 = vpack.c.b16 %v1513, %v1512
        %v1551 = vpack.c.b16 %v1515, %v1514
        %v1552 = vpack.c.b16 %v1517, %v1516
        %v1553 = vpack.c.b16 %v1519, %v1518
        %v1554 = vpack.c.b16 %v1521, %v1520
        %v1555 = vpack.c.b16 %v1523, %v1522
        %1588 = vmatprep.subr.bf16.mxu0 0
        %1589 = vmatpush1.bf16.msra.mxu0 %v1531
        %1590 = vmatprep.subr.bf16.mxu0 0
        %1591 = vmatpush1.bf16.msra.mxu0 %v1530
        %1592 = vmatprep.subr.bf16.mxu0 0
        %1593 = vmatpush1.bf16.msra.mxu0 %v1529
        %1594 = vmatprep.subr.bf16.mxu0 0
        %1595 = vmatpush1.bf16.msra.mxu0 %v1528
        %1596 = vmatprep.subr.bf16.mxu0 0
        %1597 = vmatpush1.bf16.msra.mxu0 %v1527
        %1598 = vmatprep.subr.bf16.mxu0 0
        %1599 = vmatpush1.bf16.msra.mxu0 %v1526
        %1600 = vmatprep.subr.bf16.mxu0 0
        %1601 = vmatpush1.bf16.msra.mxu0 %v1525
        %1602 = vmatprep.subr.bf16.mxu0 0
        %1603 = vmatpush1.bf16.msra.mxu0 %v1524
        %1604 = vmatprep.subr.bf16.mxu0 0
        %1605 = vmatpush2.bf16.msra.mxu0 %v1539
        %1606 = vmatprep.subr.bf16.mxu0 0
        %1607 = vmatpush2.bf16.msra.mxu0 %v1538
        %1608 = vmatprep.subr.bf16.mxu0 0
        %1609 = vmatpush2.bf16.msra.mxu0 %v1537
        %1610 = vmatprep.subr.bf16.mxu0 0
        %1611 = vmatpush2.bf16.msra.mxu0 %v1536
        %1612 = vmatprep.subr.bf16.mxu0 0
        %1613 = vmatpush2.bf16.msra.mxu0 %v1535
        %1614 = vmatprep.subr.bf16.mxu0 0
        %1615 = vmatpush2.bf16.msra.mxu0 %v1534
        %1616 = vmatprep.subr.bf16.mxu0 0
        %1617 = vmatpush2.bf16.msra.mxu0 %v1533
        %1618 = vmatprep.subr.bf16.mxu0 0
        %1619 = vmatpush2.bf16.msra.mxu0 %v1532
        %1620 = vmatprep.mubr.bf16.mxu0 %v1322
        %1621 = vmatmul.mubr.bf16.gmra.mxu0 %v1321
        %v1622 = vpop.f32.mrf.mxu0
        %v1623 = vadd.f32 %v1394, %v1622
        %v1624 = vpop.f32.mrf.mxu0
        %v1625 = vpop.f32.mrf.mxu0
        %v1626 = vpop.f32.mrf.mxu0
        %1627 = vdwg.mxu0
        %1628 = vmatprep.subr.bf16.mxu0 0
        %1629 = vmatpush1.bf16.msra.mxu0 %v1547
        %1630 = vmatprep.subr.bf16.mxu0 0
        %1631 = vmatpush1.bf16.msra.mxu0 %v1546
        %1632 = vmatprep.subr.bf16.mxu0 0
        %1633 = vmatpush1.bf16.msra.mxu0 %v1545
        %1634 = vmatprep.subr.bf16.mxu0 0
        %1635 = vmatpush1.bf16.msra.mxu0 %v1544
        %1636 = vmatprep.subr.bf16.mxu0 0
        %1637 = vmatpush1.bf16.msra.mxu0 %v1543
        %1638 = vmatprep.subr.bf16.mxu0 0
        %1639 = vmatpush1.bf16.msra.mxu0 %v1542
        %1640 = vmatprep.subr.bf16.mxu0 0
        %1641 = vmatpush1.bf16.msra.mxu0 %v1541
        %1642 = vmatprep.subr.bf16.mxu0 0
        %1643 = vmatpush1.bf16.msra.mxu0 %v1540
        %1644 = vmatprep.subr.bf16.mxu0 0
        %1645 = vmatpush2.bf16.msra.mxu0 %v1555
        %1646 = vmatprep.subr.bf16.mxu0 0
        %1647 = vmatpush2.bf16.msra.mxu0 %v1554
        %1648 = vmatprep.subr.bf16.mxu0 0
        %1649 = vmatpush2.bf16.msra.mxu0 %v1553
        %1650 = vmatprep.subr.bf16.mxu0 0
        %1651 = vmatpush2.bf16.msra.mxu0 %v1552
        %1652 = vmatprep.subr.bf16.mxu0 0
        %1653 = vmatpush2.bf16.msra.mxu0 %v1551
        %1654 = vmatprep.subr.bf16.mxu0 0
        %1655 = vmatpush2.bf16.msra.mxu0 %v1550
        %1656 = vmatprep.subr.bf16.mxu0 0
        %1657 = vmatpush2.bf16.msra.mxu0 %v1549
        %1658 = vmatprep.subr.bf16.mxu0 0
        %1659 = vmatpush2.bf16.msra.mxu0 %v1548
        %1660 = vmatprep.mubr.bf16.mxu0 %v1324
        %1661 = vmatmul.mubr.bf16.gmra.mxu0 %v1323
        %v1662 = vpop.f32.mrf.mxu0
        %v1663 = vadd.f32 %v1623, %v1662
        %v1664 = vpop.f32.mrf.mxu0
        %v1665 = vpop.f32.mrf.mxu0
        %v1666 = vpop.f32.mrf.mxu0
        %1667 = vdwg.mxu0
        %v1668 = vmax.f32 %v1663, 0.0
        %vm1669 = vcmp.lt.s32.totalorder %v1246, 10
        %v1670 = vsel %vm1669, %v1668, -1e+30
        %1671 = vmax.xlane.f32.xlu0 %v1670
        %v1672 = vpop.xlane.xlu0 %1671
        %v1673 = vsub.f32 %v1670, %v1672
        %v1674 = vmul.f32 %v1673, 1.442695
        %v1675 = vpow.pop %v1674
        %1676 = vadd.xlane.f32.xlu0 %v1675
        %v1677 = vpop.xlane.xlu0 %1676
        %v1678 = vlog2.pop %v1677
        %v1679 = vmul.f32 %v1678, 0.6931472
        %v1680 = vadd.f32 %v1672, %v1679
        %v1681 = vsub.f32 %v1670, %v1680
        %1682 = vst [vmem:[%s271] sm:$0xff] %v1681
        %s1683 = sand.u32 %s143, 1
        %s1684 = scalar_lea.sflag [#allocation6], %s1683
        %s1685 = sand.u32 %s143, 1
        %s1686 = smul.addr %s1685, 8
        %s1687 = scalar_lea.vmem [#allocation10], %s1686
        // Predicated region
        $region53: #{tpu_custom_call.1} parent=39 // pred_check
          %p1688 = pneg %p153
        $region54: #{tpu_custom_call.1} parent=39 // pred_check_branch
          %1690 = sbr.rel (%p1688) target = $region56
        $region55: #{tpu_custom_call.1} parent=39 // pred_region
          %s1692 = ssub.s32 128, 128
          %1693 = vsyncadd %s1684, %s1692
          %s1694 = smul.addr %s25, 128
          %s1695 = scalar_lea.hbm %s6, %s1694
          %s1697 = sshll.u32 %s1687, 4
          %s1698 = int_to_ptr.vmem [resolvable:$true] %s1697
          %1700 = dma.vmem_to_hbm [thread:$0]  %s1698, 128, %s1695, %s1684
        $region56: #{tpu_custom_call.1} parent=39 // pred_fallthru
          _
      $region40: #{tpu_custom_call.1} parent=5 // pred_fallthru
        _
      %p1701 = scmp.le.s32.totalorder 2, %s20
      // Predicated region
      $region57: #{tpu_custom_call.1} parent=5 // pred_check
        %p1702 = pneg %p1701
      $region58: #{tpu_custom_call.1} parent=5 // pred_check_branch
        %1704 = sbr.rel (%p1702) target = $region60
      $region59: #{tpu_custom_call.1} parent=5 // pred_region
        %s1705 = ssub.s32 %s20, 2
        // Predicated region
        $region61: #{tpu_custom_call.1} parent=59 // pred_check
          %p1706 = pneg %p159
        $region62: #{tpu_custom_call.1} parent=59 // pred_check_branch
          %1708 = sbr.rel (%p1706) target = $region64
        $region63: #{tpu_custom_call.1} parent=59 // pred_region
          %s1709 = sand.u32 %s144, 1
          %s1710 = scalar_lea.sflag [#allocation6], %s1709
          %s1711 = sand.u32 %s144, 1
          %s1712 = smul.addr %s1711, 8
          %s1713 = scalar_lea.vmem [#allocation10], %s1712
          %1714 = dma.done %s1710, 128
        $region64: #{tpu_custom_call.1} parent=59 // pred_fallthru
          _
      $region60: #{tpu_custom_call.1} parent=5 // pred_fallthru
        _
    $region6: #{tpu_custom_call.1} parent=1 // loop_footer
      %s24 = sadd.s32 1, %s20
    $region7: #{tpu_custom_call.1} parent=1 // loop_footer_branch
      %19 = sbr.rel target = $region3
    $region8: #{tpu_custom_call.1} parent=1 // loop_exit
      _
    %1715 = vsyncpa [#allocation5], 1
    %s1716 = scalar_lea.sflag [#allocation5], 1
    %1717 = vsyncpa %s1716, 1
    %1718 = vsyncpa [#allocation8], 1
    %1719 = vsyncpa [#allocation6], 1
    %s1720 = scalar_lea.sflag [#allocation6], 1
    %1721 = vsyncpa %s1720, 1

</llo_original>
